<compile_context>
chip_gen: v7x
topology: tpu7x:2x2x1
jax: 0.10.0
libtpu: 0.0.40
codegen_flags: <defaults>
</compile_context>

<pallas_src>
import jax
import jax.numpy as jnp
from jax import lax
from jax.experimental import pallas as pl
from jax.experimental.pallas import tpu as pltpu

EPS = 1e-5
_PR = 8        # sublane-aligned row offset of the scratch interior (f32 tile = 8)
_PC = 128      # lane-aligned col offset of the scratch interior (lane tile = 128)
_BLOCK_BUDGET = 2 * 1024 * 1024   # target bytes per (nb, H, W) input block
_MAX_NB = 8


def _largest_divisor_leq(n, limit):
    best = 1
    for d in range(1, n + 1):
        if d > limit:
            break
        if n % d == 0:
            best = d
    return best


def _planes_per_block(n, plane_bytes):
    limit = max(1, min(_MAX_NB, _BLOCK_BUDGET // max(plane_bytes, 1)))
    return _largest_divisor_leq(n, limit)


def _vmem_limit(working_set_bytes):
    # Actual double-buffered working set + headroom, clamped to sane bounds.
    return int(min(max(working_set_bytes + (4 << 20), 16 << 20), 100 << 20))


def _dwconv_block(x, w_ref, wbase, pad_ref):
    """3x3 depthwise conv (stride 1, zero pad 1, NO bias) of an (nb, H, W)
    block; all nb planes share the same channel's weights.

    x       : (nb, H, W) f32 value (already loaded from the input ref).
    w_ref   : (C*9,) f32 SMEM weight table (row-major 3x3 per channel).
    wbase   : scalar 9*c.
    pad_ref : (nb, _PR + H + 1, _PC + W + 1) f32 VMEM scratch.
    """
    nb, H, W = x.shape
    wp = pad_ref.shape[2]

    # Zero ONLY the 1-row conv halos; the interior is fully overwritten below.
    zero_row = jnp.zeros((nb, 1, wp), jnp.float32)
    pad_ref[:, _PR - 1:_PR, :] = zero_row                 # top halo row
    pad_ref[:, _PR + H:_PR + H + 1, :] = zero_row         # bottom halo row
    pad_ref[:, _PR:_PR + H, _PC:_PC + W] = x              # tile-aligned store

    def tap(di, dj):   # value of x[i+di-1, j+dj-1] per output (i, j)
        return pad_ref[:, _PR - 1 + di:_PR - 1 + di + H,
                       _PC - 1 + dj:_PC - 1 + dj + W]

    def w(di, dj):     # scalar SMEM read
        return w_ref[wbase + 3 * di + dj]

    # Group the 9 taps by column offset; center tap reuses the loaded value
    # (8 VMEM tap loads instead of 10 loads + a full scratch memset).
    s_l = w(0, 0) * tap(0, 0) + w(1, 0) * tap(1, 0) + w(2, 0) * tap(2, 0)
    s_c = w(0, 1) * tap(0, 1) + w(1, 1) * x + w(2, 1) * tap(2, 1)
    s_r = w(0, 2) * tap(0, 2) + w(1, 2) * tap(1, 2) + w(2, 2) * tap(2, 2)

    # Column-edge handling: the un-zeroed halo cols may hold stale/NaN data, so
    # use a select (not a multiply) to drop the contaminated output columns.
    col = lax.broadcasted_iota(jnp.int32, (1, 1, W), 2)
    s_l = jnp.where(col > 0, s_l, 0.0)
    s_r = jnp.where(col < W - 1, s_r, 0.0)
    return s_l + s_c + s_r


def _stats_kernel(x_ref, w_ref, sum_ref, ssq_ref, pad_ref):
    """Pass 1: per-channel sum / sum-of-squares of conv(x) over (N, H, W).

    Grid (nsplit, nblk, C): the leading batch-split axis is 'parallel' (each
    v7x TensorCore owns its own resident (8, C) partial block); (n, c) are
    'arbitrary' reduction axes into that block.
    """
    n = pl.program_id(1)
    c = pl.program_id(2)
    C = sum_ref.shape[1]

    @pl.when(jnp.logical_and(n == 0, c == 0))
    def _():
        sum_ref[...] = jnp.zeros_like(sum_ref)
        ssq_ref[...] = jnp.zeros_like(ssq_ref)

    x = x_ref[...]
    z = _dwconv_block(x, w_ref, 9 * c, pad_ref)

    s = jnp.sum(jnp.sum(z, axis=0), axis=(0, 1), keepdims=True)        # (1, 1)
    ss = jnp.sum(jnp.sum(z * z, axis=0), axis=(0, 1), keepdims=True)   # (1, 1)

    # Scatter the block sums into lane `c` of row 0 of this split's block.
    onehot = (lax.broadcasted_iota(jnp.int32, (1, C), 1) == c).astype(jnp.float32)
    sum_ref[0:1, :] += s * onehot
    ssq_ref[0:1, :] += ss * onehot


def _apply_kernel(x_ref, w_ref, scale_ref, shift_ref, o_ref, pad_ref):
    """Pass 2: recompute conv, apply folded BN (scale, shift), max with x."""
    c = pl.program_id(1)
    x = x_ref[...]
    z = _dwconv_block(x, w_ref, 9 * c, pad_ref)
    o_ref[...] = jnp.maximum(x, scale_ref[c] * z + shift_ref[c])


@jax.jit
def frelu(x_nchw, weight, bias, gamma, beta):
    """FReLU forward (training-mode BN).  x_nchw: (N, C, H, W) float32.
    weight: (C, 1, 3, 3); bias/gamma/beta: (C,)."""
    del bias  # a per-channel constant added before BN(train) cancels exactly
    N, C, H, W = x_nchw.shape
    x = x_nchw.astype(jnp.float32)
    w_flat = weight.astype(jnp.float32).reshape(C * 9)   # 1-D SMEM scalar table

    smem_spec = pl.BlockSpec(memory_space=pltpu.MemorySpace.SMEM)
    plane_bytes = H * W * 4

    # ---- pass 1: per-channel conv statistics (reduction over N, H, W) ------
    nsplit = 2 if N % 2 == 0 else 1           # batch split -> both TCs on v7x
    n_per = N // nsplit
    nb1 = _planes_per_block(n_per, plane_bytes)
    nblk1 = n_per // nb1
    scratch1_bytes = nb1 * (_PR + H + 1) * (_PC + W + 1) * 4
    vmem1 = _vmem_limit(2 * nb1 * plane_bytes + scratch1_bytes)

    sum_p, ssq_p = pl.pallas_call(
        _stats_kernel,
        out_shape=(jax.ShapeDtypeStruct((8 * nsplit, C), jnp.float32),
                   jax.ShapeDtypeStruct((8 * nsplit, C), jnp.float32)),
        grid=(nsplit, nblk1, C),     # channel innermost: HBM-contiguous planes
        in_specs=[pl.BlockSpec((nb1, None, H, W),
                               lambda k, n, c: (k * nblk1 + n, c, 0, 0)),
                  smem_spec],
        out_specs=(pl.BlockSpec((8, C), lambda k, n, c: (k, 0)),
                   pl.BlockSpec((8, C), lambda k, n, c: (k, 0))),
        scratch_shapes=[pltpu.VMEM((nb1, _PR + H + 1, _PC + W + 1), jnp.float32)],
        compiler_params=pltpu.CompilerParams(
            dimension_semantics=("parallel", "arbitrary", "arbitrary"),
            vmem_limit_bytes=vmem1),
    )(x, w_flat)

    # Tiny (C,)-sized BN folding between the two passes (negligible traffic).
    count = jnp.float32(N * H * W)
    mean = jnp.sum(sum_p, axis=0) / count
    # NOTE: E[z^2] - E[z]^2 in f32; adequate at these magnitudes.
    var = jnp.maximum(jnp.sum(ssq_p, axis=0) / count - mean * mean, 0.0)
    scale = gamma.astype(jnp.float32) * lax.rsqrt(var + EPS)
    shift = beta.astype(jnp.float32) - mean * scale

    # ---- pass 2: recompute conv, apply BN, max with input ------------------
    nb2 = _planes_per_block(N, plane_bytes)
    scratch2_bytes = nb2 * (_PR + H + 1) * (_PC + W + 1) * 4
    vmem2 = _vmem_limit(4 * nb2 * plane_bytes + scratch2_bytes)
    block2 = pl.BlockSpec((nb2, None, H, W), lambda n, c: (n, c, 0, 0))

    out = pl.pallas_call(
        _apply_kernel,
        out_shape=jax.ShapeDtypeStruct((N, C, H, W), jnp.float32),
        grid=(N // nb2, C),
        in_specs=[block2, smem_spec, smem_spec, smem_spec],
        out_specs=block2,
        scratch_shapes=[pltpu.VMEM((nb2, _PR + H + 1, _PC + W + 1), jnp.float32)],
        compiler_params=pltpu.CompilerParams(
            dimension_semantics=("parallel", "parallel"),   # megacore on v7x
            vmem_limit_bytes=vmem2),
    )(x, w_flat, scale, shift)
    # TODO(synk): for very large planes (nb=1 and ~5x plane working set
    # approaching v7x's 64 MiB VMEM) additionally tile H with 1-row-halo
    # blocks; full-plane blocks fit comfortably for typical image sizes.
    return out


def frelu_ref(x_nchw, weight, bias, gamma, beta):
    """Pure-JAX reference (mirrors the PyTorch training-mode forward,
    including the conv bias, which must cancel inside BN)."""
    N, C, H, W = x_nchw.shape
    x = x_nchw.astype(jnp.float32)
    y = lax.conv_general_dilated(
        x, weight.astype(jnp.float32),
        window_strides=(1, 1), padding=((1, 1), (1, 1)),
        dimension_numbers=("NCHW", "OIHW", "NCHW"),
        feature_group_count=C,
    ) + bias.reshape(1, C, 1, 1)
    mean = jnp.mean(y, axis=(0, 2, 3), keepdims=True)
    var = jnp.var(y, axis=(0, 2, 3), keepdims=True)
    ybn = gamma.reshape(1, C, 1, 1) * (y - mean) / jnp.sqrt(var + EPS) \
        + beta.reshape(1, C, 1, 1)
    return jnp.maximum(x, ybn)


if __name__ == "__main__":
    key = jax.random.PRNGKey(0)
    kx, kw, kb, kg, kbt = jax.random.split(key, 5)

    N, C, H, W, K = 2, 4, 16, 16, 3
    x = jax.random.normal(kx, (N, C, H, W), dtype=jnp.float32)

    # Synthetic parameters matching nn.Conv2d(c1, c1, 3, 1, 1, groups=c1) and
    # nn.BatchNorm2d(c1); nontrivial gamma/beta so the BN affine matters.
    weight = jax.random.normal(kw, (C, 1, K, K), dtype=jnp.float32) * 0.2
    bias = jax.random.normal(kb, (C,), dtype=jnp.float32) * 0.1
    gamma = 1.0 + 0.1 * jax.random.normal(kg, (C,), dtype=jnp.float32)
    beta = 0.1 * jax.random.normal(kbt, (C,), dtype=jnp.float32)

    out = jax.block_until_ready(frelu(x, weight, bias, gamma, beta))
    ref = frelu_ref(x, weight, bias, gamma, beta)

    assert out.shape == (N, C, H, W) and out.dtype == jnp.float32
    err = jnp.max(jnp.abs(out - ref))
    assert jnp.allclose(out, ref, rtol=1e-4, atol=1e-4), f"max err {err}"
    print("KERNEL_OK")
</pallas_src>

<mosaic_0001>
module attributes {stable_mosaic.version = 11 : i64} {
  func.func @_stats_kernel(%arg0: i32, %arg1: i32, %arg2: i32, %arg3: memref<1x1x16x16xf32, #tpu.memory_space<vmem>>, %arg4: memref<36xf32, #tpu.memory_space<smem>>, %arg5: memref<8x4xf32, #tpu.memory_space<vmem>>, %arg6: memref<8x4xf32, #tpu.memory_space<vmem>>, %arg7: memref<1x25x145xf32, #tpu.memory_space<vmem>>) attributes {dimension_semantics = [#tpu.dimension_semantics<parallel>, #tpu.dimension_semantics<arbitrary>, #tpu.dimension_semantics<arbitrary>], iteration_bounds = array<i64: 2, 1, 4>, scalar_prefetch = 0 : i64, scratch_operands = 1 : i64, tpu.core_type = #tpu.core_type<tc>, window_params = [{transform_indices = @transform_0, window_bounds = array<i64: 1, 1, 16, 16>}, {transform_indices = @transform_1, window_bounds = array<i64: 36>}, {transform_indices = @transform_2, window_bounds = array<i64: 8, 4>}, {transform_indices = @transform_3, window_bounds = array<i64: 8, 4>}]} {
    %c0_i32 = arith.constant 0 : i32
    %0 = arith.cmpi eq, %arg1, %c0_i32 : i32
    %c0_i32_0 = arith.constant 0 : i32
    %1 = arith.cmpi eq, %arg2, %c0_i32_0 : i32
    %2 = arith.andi %0, %1 : i1
    %3 = arith.extui %2 : i1 to i32
    %c0_i32_1 = arith.constant 0 : i32
    %4 = arith.cmpi ne, %3, %c0_i32_1 : i32
    scf.if %4 {
      %cst_60 = arith.constant 0.000000e+00 : f32
      %123 = vector.broadcast %cst_60 : f32 to vector<8x4xf32>
      %c0_61 = arith.constant 0 : index
      %c0_62 = arith.constant 0 : index
      %124 = vector.load %arg5[%c0_61, %c0_62] : memref<8x4xf32, #tpu.memory_space<vmem>>, vector<8x4xf32>
      tpu.vector_store %arg5[%c0_61, %c0_62], %123 {strides = array<i32>} : memref<8x4xf32, #tpu.memory_space<vmem>>, vector<8x4xf32>,
      %cst_63 = arith.constant 0.000000e+00 : f32
      %125 = vector.broadcast %cst_63 : f32 to vector<8x4xf32>
      %c0_64 = arith.constant 0 : index
      %c0_65 = arith.constant 0 : index
      %126 = vector.load %arg6[%c0_64, %c0_65] : memref<8x4xf32, #tpu.memory_space<vmem>>, vector<8x4xf32>
      tpu.vector_store %arg6[%c0_64, %c0_65], %125 {strides = array<i32>} : memref<8x4xf32, #tpu.memory_space<vmem>>, vector<8x4xf32>,
    } else {
    }
    %c0 = arith.constant 0 : index
    %c0_2 = arith.constant 0 : index
    %c0_3 = arith.constant 0 : index
    %c0_4 = arith.constant 0 : index
    %5 = vector.load %arg3[%c0, %c0_2, %c0_3, %c0_4] : memref<1x1x16x16xf32, #tpu.memory_space<vmem>>, vector<1x1x16x16xf32>
    %6 = vector.shape_cast %5 : vector<1x1x16x16xf32> to vector<1x16x16xf32>
    %c9_i32 = arith.constant 9 : i32
    %7 = arith.muli %c9_i32, %arg2 : i32
    %cst = arith.constant 0.000000e+00 : f32
    %8 = vector.broadcast %cst : f32 to vector<1x1x145xf32>
    %c0_5 = arith.constant 0 : index
    %c7 = arith.constant 7 : index
    %c0_6 = arith.constant 0 : index
    %9 = vector.load %arg7[%c0_5, %c7, %c0_6] : memref<1x25x145xf32, #tpu.memory_space<vmem>>, vector<1x1x145xf32>
    tpu.vector_store %arg7[%c0_5, %c7, %c0_6], %8 {strides = array<i32>} : memref<1x25x145xf32, #tpu.memory_space<vmem>>, vector<1x1x145xf32>,
    %c0_7 = arith.constant 0 : index
    %c24 = arith.constant 24 : index
    %c0_8 = arith.constant 0 : index
    %10 = vector.load %arg7[%c0_7, %c24, %c0_8] : memref<1x25x145xf32, #tpu.memory_space<vmem>>, vector<1x1x145xf32>
    tpu.vector_store %arg7[%c0_7, %c24, %c0_8], %8 {strides = array<i32>} : memref<1x25x145xf32, #tpu.memory_space<vmem>>, vector<1x1x145xf32>,
    %c0_9 = arith.constant 0 : index
    %c8 = arith.constant 8 : index
    %c128 = arith.constant 128 : index
    %11 = vector.load %arg7[%c0_9, %c8, %c128] : memref<1x25x145xf32, #tpu.memory_space<vmem>>, vector<1x16x16xf32>
    tpu.vector_store %arg7[%c0_9, %c8, %c128], %6 {strides = array<i32>} : memref<1x25x145xf32, #tpu.memory_space<vmem>>, vector<1x16x16xf32>,
    %c0_i32_10 = arith.constant 0 : i32
    %12 = arith.addi %7, %c0_i32_10 : i32
    %c0_i32_11 = arith.constant 0 : i32
    %13 = arith.addi %12, %c0_i32_11 : i32
    %14 = arith.index_cast %13 : i32 to index
    %15 = memref.load %arg4[%14] : memref<36xf32, #tpu.memory_space<smem>>
    %c0_12 = arith.constant 0 : index
    %c7_13 = arith.constant 7 : index
    %c127 = arith.constant 127 : index
    %16 = vector.load %arg7[%c0_12, %c7_13, %c127] : memref<1x25x145xf32, #tpu.memory_space<vmem>>, vector<1x16x16xf32>
    %17 = vector.broadcast %15 : f32 to vector<1x16x16xf32>
    %18 = arith.mulf %17, %16 : vector<1x16x16xf32>
    %c3_i32 = arith.constant 3 : i32
    %19 = arith.addi %7, %c3_i32 : i32
    %c0_i32_14 = arith.constant 0 : i32
    %20 = arith.addi %19, %c0_i32_14 : i32
    %21 = arith.index_cast %20 : i32 to index
    %22 = memref.load %arg4[%21] : memref<36xf32, #tpu.memory_space<smem>>
    %c0_15 = arith.constant 0 : index
    %c8_16 = arith.constant 8 : index
    %c127_17 = arith.constant 127 : index
    %23 = vector.load %arg7[%c0_15, %c8_16, %c127_17] : memref<1x25x145xf32, #tpu.memory_space<vmem>>, vector<1x16x16xf32>
    %24 = vector.broadcast %22 : f32 to vector<1x16x16xf32>
    %25 = arith.mulf %24, %23 : vector<1x16x16xf32>
    %26 = arith.addf %18, %25 : vector<1x16x16xf32>
    %c6_i32 = arith.constant 6 : i32
    %27 = arith.addi %7, %c6_i32 : i32
    %c0_i32_18 = arith.constant 0 : i32
    %28 = arith.addi %27, %c0_i32_18 : i32
    %29 = arith.index_cast %28 : i32 to index
    %30 = memref.load %arg4[%29] : memref<36xf32, #tpu.memory_space<smem>>
    %c0_19 = arith.constant 0 : index
    %c9 = arith.constant 9 : index
    %c127_20 = arith.constant 127 : index
    %31 = vector.load %arg7[%c0_19, %c9, %c127_20] : memref<1x25x145xf32, #tpu.memory_space<vmem>>, vector<1x16x16xf32>
    %32 = vector.broadcast %30 : f32 to vector<1x16x16xf32>
    %33 = arith.mulf %32, %31 : vector<1x16x16xf32>
    %34 = arith.addf %26, %33 : vector<1x16x16xf32>
    %c0_i32_21 = arith.constant 0 : i32
    %35 = arith.addi %7, %c0_i32_21 : i32
    %c1_i32 = arith.constant 1 : i32
    %36 = arith.addi %35, %c1_i32 : i32
    %37 = arith.index_cast %36 : i32 to index
    %38 = memref.load %arg4[%37] : memref<36xf32, #tpu.memory_space<smem>>
    %c0_22 = arith.constant 0 : index
    %c7_23 = arith.constant 7 : index
    %c128_24 = arith.constant 128 : index
    %39 = vector.load %arg7[%c0_22, %c7_23, %c128_24] : memref<1x25x145xf32, #tpu.memory_space<vmem>>, vector<1x16x16xf32>
    %40 = vector.broadcast %38 : f32 to vector<1x16x16xf32>
    %41 = arith.mulf %40, %39 : vector<1x16x16xf32>
    %c3_i32_25 = arith.constant 3 : i32
    %42 = arith.addi %7, %c3_i32_25 : i32
    %c1_i32_26 = arith.constant 1 : i32
    %43 = arith.addi %42, %c1_i32_26 : i32
    %44 = arith.index_cast %43 : i32 to index
    %45 = memref.load %arg4[%44] : memref<36xf32, #tpu.memory_space<smem>>
    %46 = vector.broadcast %45 : f32 to vector<1x16x16xf32>
    %47 = arith.mulf %46, %6 : vector<1x16x16xf32>
    %48 = arith.addf %41, %47 : vector<1x16x16xf32>
    %c6_i32_27 = arith.constant 6 : i32
    %49 = arith.addi %7, %c6_i32_27 : i32
    %c1_i32_28 = arith.constant 1 : i32
    %50 = arith.addi %49, %c1_i32_28 : i32
    %51 = arith.index_cast %50 : i32 to index
    %52 = memref.load %arg4[%51] : memref<36xf32, #tpu.memory_space<smem>>
    %c0_29 = arith.constant 0 : index
    %c9_30 = arith.constant 9 : index
    %c128_31 = arith.constant 128 : index
    %53 = vector.load %arg7[%c0_29, %c9_30, %c128_31] : memref<1x25x145xf32, #tpu.memory_space<vmem>>, vector<1x16x16xf32>
    %54 = vector.broadcast %52 : f32 to vector<1x16x16xf32>
    %55 = arith.mulf %54, %53 : vector<1x16x16xf32>
    %56 = arith.addf %48, %55 : vector<1x16x16xf32>
    %c0_i32_32 = arith.constant 0 : i32
    %57 = arith.addi %7, %c0_i32_32 : i32
    %c2_i32 = arith.constant 2 : i32
    %58 = arith.addi %57, %c2_i32 : i32
    %59 = arith.index_cast %58 : i32 to index
    %60 = memref.load %arg4[%59] : memref<36xf32, #tpu.memory_space<smem>>
    %c0_33 = arith.constant 0 : index
    %c7_34 = arith.constant 7 : index
    %c129 = arith.constant 129 : index
    %61 = vector.load %arg7[%c0_33, %c7_34, %c129] : memref<1x25x145xf32, #tpu.memory_space<vmem>>, vector<1x16x16xf32>
    %62 = vector.broadcast %60 : f32 to vector<1x16x16xf32>
    %63 = arith.mulf %62, %61 : vector<1x16x16xf32>
    %c3_i32_35 = arith.constant 3 : i32
    %64 = arith.addi %7, %c3_i32_35 : i32
    %c2_i32_36 = arith.constant 2 : i32
    %65 = arith.addi %64, %c2_i32_36 : i32
    %66 = arith.index_cast %65 : i32 to index
    %67 = memref.load %arg4[%66] : memref<36xf32, #tpu.memory_space<smem>>
    %c0_37 = arith.constant 0 : index
    %c8_38 = arith.constant 8 : index
    %c129_39 = arith.constant 129 : index
    %68 = vector.load %arg7[%c0_37, %c8_38, %c129_39] : memref<1x25x145xf32, #tpu.memory_space<vmem>>, vector<1x16x16xf32>
    %69 = vector.broadcast %67 : f32 to vector<1x16x16xf32>
    %70 = arith.mulf %69, %68 : vector<1x16x16xf32>
    %71 = arith.addf %63, %70 : vector<1x16x16xf32>
    %c6_i32_40 = arith.constant 6 : i32
    %72 = arith.addi %7, %c6_i32_40 : i32
    %c2_i32_41 = arith.constant 2 : i32
    %73 = arith.addi %72, %c2_i32_41 : i32
    %74 = arith.index_cast %73 : i32 to index
    %75 = memref.load %arg4[%74] : memref<36xf32, #tpu.memory_space<smem>>
    %c0_42 = arith.constant 0 : index
    %c9_43 = arith.constant 9 : index
    %c129_44 = arith.constant 129 : index
    %76 = vector.load %arg7[%c0_42, %c9_43, %c129_44] : memref<1x25x145xf32, #tpu.memory_space<vmem>>, vector<1x16x16xf32>
    %77 = vector.broadcast %75 : f32 to vector<1x16x16xf32>
    %78 = arith.mulf %77, %76 : vector<1x16x16xf32>
    %79 = arith.addf %71, %78 : vector<1x16x16xf32>
    %80 = tpu.iota {dimensions = array<i32: 2>} : vector<1x1x16xi32>
    %c0_i32_45 = arith.constant 0 : i32
    %81 = vector.broadcast %c0_i32_45 : i32 to vector<1x1x16xi32>
    %82 = arith.cmpi sgt, %80, %81 : vector<1x1x16xi32>
    %cst_46 = arith.constant 0.000000e+00 : f32
    %83 = vector.shape_cast %82 : vector<1x1x16xi1> to vector<1x1x16xi1>
    %84 = vector.broadcast %83 : vector<1x1x16xi1> to vector<1x16x16xi1>
    %85 = vector.broadcast %cst_46 : f32 to vector<1x16x16xf32>
    %86 = arith.select %84, %34, %85 : vector<1x16x16xi1>, vector<1x16x16xf32>
    %c15_i32 = arith.constant 15 : i32
    %87 = vector.broadcast %c15_i32 : i32 to vector<1x1x16xi32>
    %88 = arith.cmpi slt, %80, %87 : vector<1x1x16xi32>
    %cst_47 = arith.constant 0.000000e+00 : f32
    %89 = vector.shape_cast %88 : vector<1x1x16xi1> to vector<1x1x16xi1>
    %90 = vector.broadcast %89 : vector<1x1x16xi1> to vector<1x16x16xi1>
    %91 = vector.broadcast %cst_47 : f32 to vector<1x16x16xf32>
    %92 = arith.select %90, %79, %91 : vector<1x16x16xi1>, vector<1x16x16xf32>
    %93 = arith.addf %86, %56 : vector<1x16x16xf32>
    %94 = arith.addf %93, %92 : vector<1x16x16xf32>
    %cst_48 = arith.constant dense<0.000000e+00> : vector<16x16xf32>
    %95 = vector.multi_reduction <add>, %94, %cst_48 [0] : vector<1x16x16xf32> to vector<16x16xf32>
    %96 = vector.shape_cast %95 : vector<16x16xf32> to vector<1x16x16xf32>
    %cst_49 = arith.constant dense<0.000000e+00> : vector<1xf32>
    %97 = vector.multi_reduction <add>, %96, %cst_49 [1, 2] : vector<1x16x16xf32> to vector<1xf32>
    %98 = vector.shape_cast %97 : vector<1xf32> to vector<1x1x1xf32>
    %99 = vector.extract %98[0, 0, 0] : f32 from vector<1x1x1xf32>
    %100 = vector.broadcast %99 : f32 to vector<1x1xf32>
    %101 = arith.mulf %94, %94 : vector<1x16x16xf32>
    %cst_50 = arith.constant dense<0.000000e+00> : vector<16x16xf32>
    %102 = vector.multi_reduction <add>, %101, %cst_50 [0] : vector<1x16x16xf32> to vector<16x16xf32>
    %103 = vector.shape_cast %102 : vector<16x16xf32> to vector<1x16x16xf32>
    %cst_51 = arith.constant dense<0.000000e+00> : vector<1xf32>
    %104 = vector.multi_reduction <add>, %103, %cst_51 [1, 2] : vector<1x16x16xf32> to vector<1xf32>
    %105 = vector.shape_cast %104 : vector<1xf32> to vector<1x1x1xf32>
    %106 = vector.extract %105[0, 0, 0] : f32 from vector<1x1x1xf32>
    %107 = vector.broadcast %106 : f32 to vector<1x1xf32>
    %108 = tpu.iota {dimensions = array<i32: 1>} : vector<1x4xi32>
    %109 = vector.broadcast %arg2 : i32 to vector<1x4xi32>
    %110 = arith.cmpi eq, %108, %109 : vector<1x4xi32>
    %111 = arith.extui %110 : vector<1x4xi1> to vector<1x4xi32>
    %112 = arith.sitofp %111 : vector<1x4xi32> to vector<1x4xf32>
    %c0_52 = arith.constant 0 : index
    %c0_53 = arith.constant 0 : index
    %113 = vector.load %arg5[%c0_52, %c0_53] : memref<8x4xf32, #tpu.memory_space<vmem>>, vector<1x4xf32>
    %114 = vector.broadcast %100 : vector<1x1xf32> to vector<1x4xf32>
    %115 = arith.mulf %114, %112 : vector<1x4xf32>
    %116 = arith.addf %113, %115 : vector<1x4xf32>
    %c0_54 = arith.constant 0 : index
    %c0_55 = arith.constant 0 : index
    %117 = vector.load %arg5[%c0_54, %c0_55] : memref<8x4xf32, #tpu.memory_space<vmem>>, vector<1x4xf32>
    tpu.vector_store %arg5[%c0_54, %c0_55], %116 {strides = array<i32>} : memref<8x4xf32, #tpu.memory_space<vmem>>, vector<1x4xf32>,
    %c0_56 = arith.constant 0 : index
    %c0_57 = arith.constant 0 : index
    %118 = vector.load %arg6[%c0_56, %c0_57] : memref<8x4xf32, #tpu.memory_space<vmem>>, vector<1x4xf32>
    %119 = vector.broadcast %107 : vector<1x1xf32> to vector<1x4xf32>
    %120 = arith.mulf %119, %112 : vector<1x4xf32>
    %121 = arith.addf %118, %120 : vector<1x4xf32>
    %c0_58 = arith.constant 0 : index
    %c0_59 = arith.constant 0 : index
    %122 = vector.load %arg6[%c0_58, %c0_59] : memref<8x4xf32, #tpu.memory_space<vmem>>, vector<1x4xf32>
    tpu.vector_store %arg6[%c0_58, %c0_59], %121 {strides = array<i32>} : memref<8x4xf32, #tpu.memory_space<vmem>>, vector<1x4xf32>,
    return
  }
  func.func @transform_0(%arg0: i32, %arg1: i32, %arg2: i32) -> (i32, i32, i32, i32) {
    %c1_i32 = arith.constant 1 : i32
    %0 = arith.muli %arg0, %c1_i32 : i32
    %1 = arith.addi %0, %arg1 : i32
    %c0_i32 = arith.constant 0 : i32
    %c0_i32_0 = arith.constant 0 : i32
    %c0_i32_1 = arith.constant 0 : i32
    return %1, %arg2, %c0_i32, %c0_i32_0 : i32, i32, i32, i32
  }
  func.func @transform_1(%arg0: i32, %arg1: i32, %arg2: i32) -> i32 {
    %c0_i32 = arith.constant 0 : i32
    %c0_i32_0 = arith.constant 0 : i32
    return %c0_i32 : i32
  }
  func.func @transform_2(%arg0: i32, %arg1: i32, %arg2: i32) -> (i32, i32) {
    %c0_i32 = arith.constant 0 : i32
    %c0_i32_0 = arith.constant 0 : i32
    return %arg0, %c0_i32 : i32, i32
  }
  func.func @transform_3(%arg0: i32, %arg1: i32, %arg2: i32) -> (i32, i32) {
    %c0_i32 = arith.constant 0 : i32
    %c0_i32_0 = arith.constant 0 : i32
    return %arg0, %c0_i32 : i32, i32
  }
}

module attributes {stable_mosaic.version = 11 : i64} {
  func.func @_apply_kernel(%arg0: i32, %arg1: i32, %arg2: memref<2x1x16x16xf32, #tpu.memory_space<vmem>>, %arg3: memref<36xf32, #tpu.memory_space<smem>>, %arg4: memref<4xf32, #tpu.memory_space<smem>>, %arg5: memref<4xf32, #tpu.memory_space<smem>>, %arg6: memref<2x1x16x16xf32, #tpu.memory_space<vmem>>, %arg7: memref<2x25x145xf32, #tpu.memory_space<vmem>>) attributes {dimension_semantics = [#tpu.dimension_semantics<parallel>, #tpu.dimension_semantics<parallel>], iteration_bounds = array<i64: 1, 4>, scalar_prefetch = 0 : i64, scratch_operands = 1 : i64, tpu.core_type = #tpu.core_type<tc>, window_params = [{transform_indices = @transform_0, window_bounds = array<i64: 2, 1, 16, 16>}, {transform_indices = @transform_1, window_bounds = array<i64: 36>}, {transform_indices = @transform_2, window_bounds = array<i64: 4>}, {transform_indices = @transform_3, window_bounds = array<i64: 4>}, {transform_indices = @transform_4, window_bounds = array<i64: 2, 1, 16, 16>}]} {
    %c0 = arith.constant 0 : index
    %c0_0 = arith.constant 0 : index
    %c0_1 = arith.constant 0 : index
    %c0_2 = arith.constant 0 : index
    %0 = vector.load %arg2[%c0, %c0_0, %c0_1, %c0_2] : memref<2x1x16x16xf32, #tpu.memory_space<vmem>>, vector<2x1x16x16xf32>
    %1 = vector.shape_cast %0 : vector<2x1x16x16xf32> to vector<2x16x16xf32>
    %c9_i32 = arith.constant 9 : i32
    %2 = arith.muli %c9_i32, %arg1 : i32
    %cst = arith.constant 0.000000e+00 : f32
    %3 = vector.broadcast %cst : f32 to vector<2x1x145xf32>
    %c0_3 = arith.constant 0 : index
    %c7 = arith.constant 7 : index
    %c0_4 = arith.constant 0 : index
    %4 = vector.load %arg7[%c0_3, %c7, %c0_4] : memref<2x25x145xf32, #tpu.memory_space<vmem>>, vector<2x1x145xf32>
    tpu.vector_store %arg7[%c0_3, %c7, %c0_4], %3 {strides = array<i32>} : memref<2x25x145xf32, #tpu.memory_space<vmem>>, vector<2x1x145xf32>,
    %c0_5 = arith.constant 0 : index
    %c24 = arith.constant 24 : index
    %c0_6 = arith.constant 0 : index
    %5 = vector.load %arg7[%c0_5, %c24, %c0_6] : memref<2x25x145xf32, #tpu.memory_space<vmem>>, vector<2x1x145xf32>
    tpu.vector_store %arg7[%c0_5, %c24, %c0_6], %3 {strides = array<i32>} : memref<2x25x145xf32, #tpu.memory_space<vmem>>, vector<2x1x145xf32>,
    %c0_7 = arith.constant 0 : index
    %c8 = arith.constant 8 : index
    %c128 = arith.constant 128 : index
    %6 = vector.load %arg7[%c0_7, %c8, %c128] : memref<2x25x145xf32, #tpu.memory_space<vmem>>, vector<2x16x16xf32>
    tpu.vector_store %arg7[%c0_7, %c8, %c128], %1 {strides = array<i32>} : memref<2x25x145xf32, #tpu.memory_space<vmem>>, vector<2x16x16xf32>,
    %c0_i32 = arith.constant 0 : i32
    %7 = arith.addi %2, %c0_i32 : i32
    %c0_i32_8 = arith.constant 0 : i32
    %8 = arith.addi %7, %c0_i32_8 : i32
    %9 = arith.index_cast %8 : i32 to index
    %10 = memref.load %arg3[%9] : memref<36xf32, #tpu.memory_space<smem>>
    %c0_9 = arith.constant 0 : index
    %c7_10 = arith.constant 7 : index
    %c127 = arith.constant 127 : index
    %11 = vector.load %arg7[%c0_9, %c7_10, %c127] : memref<2x25x145xf32, #tpu.memory_space<vmem>>, vector<2x16x16xf32>
    %12 = vector.broadcast %10 : f32 to vector<2x16x16xf32>
    %13 = arith.mulf %12, %11 : vector<2x16x16xf32>
    %c3_i32 = arith.constant 3 : i32
    %14 = arith.addi %2, %c3_i32 : i32
    %c0_i32_11 = arith.constant 0 : i32
    %15 = arith.addi %14, %c0_i32_11 : i32
    %16 = arith.index_cast %15 : i32 to index
    %17 = memref.load %arg3[%16] : memref<36xf32, #tpu.memory_space<smem>>
    %c0_12 = arith.constant 0 : index
    %c8_13 = arith.constant 8 : index
    %c127_14 = arith.constant 127 : index
    %18 = vector.load %arg7[%c0_12, %c8_13, %c127_14] : memref<2x25x145xf32, #tpu.memory_space<vmem>>, vector<2x16x16xf32>
    %19 = vector.broadcast %17 : f32 to vector<2x16x16xf32>
    %20 = arith.mulf %19, %18 : vector<2x16x16xf32>
    %21 = arith.addf %13, %20 : vector<2x16x16xf32>
    %c6_i32 = arith.constant 6 : i32
    %22 = arith.addi %2, %c6_i32 : i32
    %c0_i32_15 = arith.constant 0 : i32
    %23 = arith.addi %22, %c0_i32_15 : i32
    %24 = arith.index_cast %23 : i32 to index
    %25 = memref.load %arg3[%24] : memref<36xf32, #tpu.memory_space<smem>>
    %c0_16 = arith.constant 0 : index
    %c9 = arith.constant 9 : index
    %c127_17 = arith.constant 127 : index
    %26 = vector.load %arg7[%c0_16, %c9, %c127_17] : memref<2x25x145xf32, #tpu.memory_space<vmem>>, vector<2x16x16xf32>
    %27 = vector.broadcast %25 : f32 to vector<2x16x16xf32>
    %28 = arith.mulf %27, %26 : vector<2x16x16xf32>
    %29 = arith.addf %21, %28 : vector<2x16x16xf32>
    %c0_i32_18 = arith.constant 0 : i32
    %30 = arith.addi %2, %c0_i32_18 : i32
    %c1_i32 = arith.constant 1 : i32
    %31 = arith.addi %30, %c1_i32 : i32
    %32 = arith.index_cast %31 : i32 to index
    %33 = memref.load %arg3[%32] : memref<36xf32, #tpu.memory_space<smem>>
    %c0_19 = arith.constant 0 : index
    %c7_20 = arith.constant 7 : index
    %c128_21 = arith.constant 128 : index
    %34 = vector.load %arg7[%c0_19, %c7_20, %c128_21] : memref<2x25x145xf32, #tpu.memory_space<vmem>>, vector<2x16x16xf32>
    %35 = vector.broadcast %33 : f32 to vector<2x16x16xf32>
    %36 = arith.mulf %35, %34 : vector<2x16x16xf32>
    %c3_i32_22 = arith.constant 3 : i32
    %37 = arith.addi %2, %c3_i32_22 : i32
    %c1_i32_23 = arith.constant 1 : i32
    %38 = arith.addi %37, %c1_i32_23 : i32
    %39 = arith.index_cast %38 : i32 to index
    %40 = memref.load %arg3[%39] : memref<36xf32, #tpu.memory_space<smem>>
    %41 = vector.broadcast %40 : f32 to vector<2x16x16xf32>
    %42 = arith.mulf %41, %1 : vector<2x16x16xf32>
    %43 = arith.addf %36, %42 : vector<2x16x16xf32>
    %c6_i32_24 = arith.constant 6 : i32
    %44 = arith.addi %2, %c6_i32_24 : i32
    %c1_i32_25 = arith.constant 1 : i32
    %45 = arith.addi %44, %c1_i32_25 : i32
    %46 = arith.index_cast %45 : i32 to index
    %47 = memref.load %arg3[%46] : memref<36xf32, #tpu.memory_space<smem>>
    %c0_26 = arith.constant 0 : index
    %c9_27 = arith.constant 9 : index
    %c128_28 = arith.constant 128 : index
    %48 = vector.load %arg7[%c0_26, %c9_27, %c128_28] : memref<2x25x145xf32, #tpu.memory_space<vmem>>, vector<2x16x16xf32>
    %49 = vector.broadcast %47 : f32 to vector<2x16x16xf32>
    %50 = arith.mulf %49, %48 : vector<2x16x16xf32>
    %51 = arith.addf %43, %50 : vector<2x16x16xf32>
    %c0_i32_29 = arith.constant 0 : i32
    %52 = arith.addi %2, %c0_i32_29 : i32
    %c2_i32 = arith.constant 2 : i32
    %53 = arith.addi %52, %c2_i32 : i32
    %54 = arith.index_cast %53 : i32 to index
    %55 = memref.load %arg3[%54] : memref<36xf32, #tpu.memory_space<smem>>
    %c0_30 = arith.constant 0 : index
    %c7_31 = arith.constant 7 : index
    %c129 = arith.constant 129 : index
    %56 = vector.load %arg7[%c0_30, %c7_31, %c129] : memref<2x25x145xf32, #tpu.memory_space<vmem>>, vector<2x16x16xf32>
    %57 = vector.broadcast %55 : f32 to vector<2x16x16xf32>
    %58 = arith.mulf %57, %56 : vector<2x16x16xf32>
    %c3_i32_32 = arith.constant 3 : i32
    %59 = arith.addi %2, %c3_i32_32 : i32
    %c2_i32_33 = arith.constant 2 : i32
    %60 = arith.addi %59, %c2_i32_33 : i32
    %61 = arith.index_cast %60 : i32 to index
    %62 = memref.load %arg3[%61] : memref<36xf32, #tpu.memory_space<smem>>
    %c0_34 = arith.constant 0 : index
    %c8_35 = arith.constant 8 : index
    %c129_36 = arith.constant 129 : index
    %63 = vector.load %arg7[%c0_34, %c8_35, %c129_36] : memref<2x25x145xf32, #tpu.memory_space<vmem>>, vector<2x16x16xf32>
    %64 = vector.broadcast %62 : f32 to vector<2x16x16xf32>
    %65 = arith.mulf %64, %63 : vector<2x16x16xf32>
    %66 = arith.addf %58, %65 : vector<2x16x16xf32>
    %c6_i32_37 = arith.constant 6 : i32
    %67 = arith.addi %2, %c6_i32_37 : i32
    %c2_i32_38 = arith.constant 2 : i32
    %68 = arith.addi %67, %c2_i32_38 : i32
    %69 = arith.index_cast %68 : i32 to index
    %70 = memref.load %arg3[%69] : memref<36xf32, #tpu.memory_space<smem>>
    %c0_39 = arith.constant 0 : index
    %c9_40 = arith.constant 9 : index
    %c129_41 = arith.constant 129 : index
    %71 = vector.load %arg7[%c0_39, %c9_40, %c129_41] : memref<2x25x145xf32, #tpu.memory_space<vmem>>, vector<2x16x16xf32>
    %72 = vector.broadcast %70 : f32 to vector<2x16x16xf32>
    %73 = arith.mulf %72, %71 : vector<2x16x16xf32>
    %74 = arith.addf %66, %73 : vector<2x16x16xf32>
    %75 = tpu.iota {dimensions = array<i32: 2>} : vector<1x1x16xi32>
    %c0_i32_42 = arith.constant 0 : i32
    %76 = vector.broadcast %c0_i32_42 : i32 to vector<1x1x16xi32>
    %77 = arith.cmpi sgt, %75, %76 : vector<1x1x16xi32>
    %cst_43 = arith.constant 0.000000e+00 : f32
    %78 = vector.shape_cast %77 : vector<1x1x16xi1> to vector<1x1x16xi1>
    %79 = vector.broadcast %78 : vector<1x1x16xi1> to vector<2x16x16xi1>
    %80 = vector.broadcast %cst_43 : f32 to vector<2x16x16xf32>
    %81 = arith.select %79, %29, %80 : vector<2x16x16xi1>, vector<2x16x16xf32>
    %c15_i32 = arith.constant 15 : i32
    %82 = vector.broadcast %c15_i32 : i32 to vector<1x1x16xi32>
    %83 = arith.cmpi slt, %75, %82 : vector<1x1x16xi32>
    %cst_44 = arith.constant 0.000000e+00 : f32
    %84 = vector.shape_cast %83 : vector<1x1x16xi1> to vector<1x1x16xi1>
    %85 = vector.broadcast %84 : vector<1x1x16xi1> to vector<2x16x16xi1>
    %86 = vector.broadcast %cst_44 : f32 to vector<2x16x16xf32>
    %87 = arith.select %85, %74, %86 : vector<2x16x16xi1>, vector<2x16x16xf32>
    %88 = arith.addf %81, %51 : vector<2x16x16xf32>
    %89 = arith.addf %88, %87 : vector<2x16x16xf32>
    %90 = arith.index_cast %arg1 : i32 to index
    %91 = memref.load %arg4[%90] : memref<4xf32, #tpu.memory_space<smem>>
    %92 = vector.broadcast %91 : f32 to vector<2x16x16xf32>
    %93 = arith.mulf %92, %89 : vector<2x16x16xf32>
    %94 = arith.index_cast %arg1 : i32 to index
    %95 = memref.load %arg5[%94] : memref<4xf32, #tpu.memory_space<smem>>
    %96 = vector.broadcast %95 : f32 to vector<2x16x16xf32>
    %97 = arith.addf %93, %96 : vector<2x16x16xf32>
    %98 = arith.maximumf %1, %97 : vector<2x16x16xf32>
    %c0_45 = arith.constant 0 : index
    %c0_46 = arith.constant 0 : index
    %c0_47 = arith.constant 0 : index
    %c0_48 = arith.constant 0 : index
    %99 = vector.load %arg6[%c0_45, %c0_46, %c0_47, %c0_48] : memref<2x1x16x16xf32, #tpu.memory_space<vmem>>, vector<2x1x16x16xf32>
    %100 = vector.shape_cast %99 : vector<2x1x16x16xf32> to vector<2x16x16xf32>
    %101 = vector.shape_cast %98 : vector<2x16x16xf32> to vector<2x1x16x16xf32>
    tpu.vector_store %arg6[%c0_45, %c0_46, %c0_47, %c0_48], %101 {strides = array<i32>} : memref<2x1x16x16xf32, #tpu.memory_space<vmem>>, vector<2x1x16x16xf32>,
    return
  }
  func.func @transform_0(%arg0: i32, %arg1: i32) -> (i32, i32, i32, i32) {
    %c0_i32 = arith.constant 0 : i32
    %c0_i32_0 = arith.constant 0 : i32
    %c0_i32_1 = arith.constant 0 : i32
    return %arg0, %arg1, %c0_i32, %c0_i32_0 : i32, i32, i32, i32
  }
  func.func @transform_1(%arg0: i32, %arg1: i32) -> i32 {
    %c0_i32 = arith.constant 0 : i32
    %c0_i32_0 = arith.constant 0 : i32
    return %c0_i32 : i32
  }
  func.func @transform_2(%arg0: i32, %arg1: i32) -> i32 {
    %c0_i32 = arith.constant 0 : i32
    %c0_i32_0 = arith.constant 0 : i32
    return %c0_i32 : i32
  }
  func.func @transform_3(%arg0: i32, %arg1: i32) -> i32 {
    %c0_i32 = arith.constant 0 : i32
    %c0_i32_0 = arith.constant 0 : i32
    return %c0_i32 : i32
  }
  func.func @transform_4(%arg0: i32, %arg1: i32) -> (i32, i32, i32, i32) {
    %c0_i32 = arith.constant 0 : i32
    %c0_i32_0 = arith.constant 0 : i32
    %c0_i32_1 = arith.constant 0 : i32
    return %arg0, %arg1, %c0_i32, %c0_i32_0 : i32, i32, i32, i32
  }
}

</mosaic_0001>

<llo_original>
// kernel: frelu.2
$region0: #{frelu.2}
  #allocation0 [shape = 'u32[]', space=smem, size = 0x4, offset = 0x4, fixed_abs, tag = 'smem constant byte address 0x4 - core index']
  #allocation1 [shape = 'u32[144,128]{1,0:T(1,128)}', space=vmem, size = 0x12000, scoped, tag = 'internal scratch']
  #allocation2 [shape = 'f32[1,25,145]{2,1,0:T(8,128)}', space=vmem, size = 0x8000, scoped, tag = 'scratch operand']
  %s0 = inlined_call_operand.hbm [shape: f32[2,4,16,16], index: 0, kind: input, shape index: {}]
  %s1 = inlined_call_operand.vmem [shape: f32[36], index: 1, kind: input, shape index: {}]
  %s2 = inlined_call_operand.vmem [shape: f32[16,4], index: 2, kind: output, shape index: {0}]
  %s3 = inlined_call_operand.vmem [shape: f32[16,4], index: 3, kind: output, shape index: {1}]
  %4 = xla_tuple %s2, %s3
  %s5 = sld [smem:[#allocation0]]
  $region61: #{frelu.2} parent=0
    _
  %s7 = ssub.s32 1, %s5
  %s8 = scalar_select 0, %s7, %s5
  $region1: #{frelu.2} parent=0
    #allocation3 [shape = 'u8[16384]{0}', space=vmem, size = 0x4000, scoped, tag = 'input window, operand 0']
    #allocation4 [shape = 's32[2]{0}', space=sflag, size = 0x8, scoped, tag = 'scoped memory for frelu.2']
    #allocation5 [shape = 's32[2]{0}', space=sflag, size = 0x8, scoped, tag = 'scoped memory for frelu.2']
    #allocation6 [shape = 'u8[512]{0}', space=smem, size = 0x200, scoped, tag = 'input window, operand 1, single buffered']
    %9 = vsyncpa [#allocation4], 0
    %s10 = scalar_lea.sflag [#allocation4], 1
    %11 = vsyncpa %s10, 0
    %12 = vsyncpa [#allocation5], 0
    loop: start=0, step=1, limit=10
    $region2: #{frelu.2} parent=1 // loop_pre_header
      _
    $region3: #{frelu.2} parent=1 // loop_header
      %s14 = sphi 0, %s18
      %p15 = scmp.ge.s32.totalorder %s14, 10
      %s21 = sphi 0, %s40
      %s22 = sphi 0, %s36
      %s23 = sphi 0, %s32
      %s24 = sphi 0, %s21
      %s25 = sphi 0, %s22
      %s26 = sphi 0, %s23
      %s27 = sphi 0, %s24
      %s28 = sphi 0, %s25
      %s29 = sphi 0, %s26
      %s47 = sphi 0, %s49
      %s50 = sphi 0, %s47
      %s51 = sphi 0, %s50
      %s67 = sphi 0, %s51
      %s71 = sphi 0, %s71
      %s73 = sphi 0, %s71
      %s74 = sphi 0, %s73
      %s88 = sphi 0, %s74
      %s94 = sphi 0, %s96
      %s97 = sphi 0, %s94
      %s98 = sphi 0, %s97
      %s114 = sphi 0, %s98
      %s120 = sphi 0, %s122
      %s123 = sphi 0, %s120
      %s124 = sphi 0, %s123
      %s140 = sphi 0, %s124
    $region4: #{frelu.2} parent=1 // loop_header_branch
      %17 = sbr.rel (%p15) target = $region8
    $region5: #{frelu.2} parent=1 // loop_body
      %s19 = ssub.s32 %s14, 1
      %s20 = ssub.s32 %s14, 2
      %s30 = sadd.s32 1, %s23
      %p31 = scmp.ge.s32.totalorder %s30, 4
      %s32 = scalar_select %p31, 0, %s30
      %s33 = sadd.s32 1, %s22
      %s34 = scalar_select %p31, %s33, %s22
      %p35 = scmp.ge.s32.totalorder %s34, 1
      %s36 = scalar_select %p35, 0, %s34
      %s37 = sadd.s32 1, %s21
      %s38 = scalar_select %p35, %s37, %s21
      %p39 = scmp.ge.s32.totalorder %s38, 2
      %s40 = scalar_select %p39, 0, %s38
      %s41 = sadd.s32 %s21, %s22
      %s42 = sadd.s32 %s40, %s36
      %s43 = ssub.s32 %s41, %s42
      %s44 = ssub.s32 %s23, %s32
      %s45 = sor.u32 %s43, %s44
      %p46 = scmp.eq.s32.totalorder %s45, 0
      %s48 = sadd.s32 %s47, 1
      %s49 = scalar_select %p46, %s47, %s48
      %p52 = pneg %p46
      %p53 = scmp.eq.s32.totalorder %s14, 7
      %p54 = por %p52, %p53
      %p55 = scmp.ne.s32.totalorder %s47, %s50
      %p56 = scmp.eq.s32.totalorder %s14, 0
      %p57 = por %p55, %p56
      %p58 = scmp.ne.s32.totalorder %s47, %s50
      %p59 = scmp.eq.s32.totalorder %s19, 7
      %p60 = por %p58, %p59
      %p61 = scmp.ne.s32.totalorder %s50, %s51
      %p62 = scmp.eq.s32.totalorder %s19, 0
      %p63 = por %p61, %p62
      %p64 = scmp.ne.s32.totalorder %s50, %s51
      %p65 = scmp.eq.s32.totalorder %s20, 7
      %p66 = por %p64, %p65
      %p68 = scmp.ne.s32.totalorder %s51, %s67
      %p69 = scmp.eq.s32.totalorder %s20, 0
      %p70 = por %p68, %p69
      %s72 = sadd.s32 %s71, 1
      %p75 = scmp.eq.s32.totalorder %s14, 7
      %p76 = scmp.ne.s32.totalorder %s71, %s73
      %p77 = scmp.eq.s32.totalorder %s14, 0
      %p78 = por %p76, %p77
      %p79 = scmp.ne.s32.totalorder %s71, %s73
      %p80 = scmp.eq.s32.totalorder %s19, 7
      %p81 = por %p79, %p80
      %p82 = scmp.ne.s32.totalorder %s73, %s74
      %p83 = scmp.eq.s32.totalorder %s19, 0
      %p84 = por %p82, %p83
      %p85 = scmp.ne.s32.totalorder %s73, %s74
      %p86 = scmp.eq.s32.totalorder %s20, 7
      %p87 = por %p85, %p86
      %p89 = scmp.ne.s32.totalorder %s74, %s88
      %p90 = scmp.eq.s32.totalorder %s20, 0
      %p91 = por %p89, %p90
      %s92 = ssub.s32 %s21, %s40
      %p93 = scmp.eq.s32.totalorder %s92, 0
      %s95 = sadd.s32 %s94, 1
      %s96 = scalar_select %p93, %s94, %s95
      %p99 = pneg %p93
      %p100 = scmp.eq.s32.totalorder %s14, 7
      %p101 = por %p99, %p100
      %p102 = scmp.ne.s32.totalorder %s94, %s97
      %p103 = scmp.eq.s32.totalorder %s14, 0
      %p104 = por %p102, %p103
      %p105 = scmp.ne.s32.totalorder %s94, %s97
      %p106 = scmp.eq.s32.totalorder %s19, 7
      %p107 = por %p105, %p106
      %p108 = scmp.ne.s32.totalorder %s97, %s98
      %p109 = scmp.eq.s32.totalorder %s19, 0
      %p110 = por %p108, %p109
      %p111 = scmp.ne.s32.totalorder %s97, %s98
      %p112 = scmp.eq.s32.totalorder %s20, 7
      %p113 = por %p111, %p112
      %p115 = scmp.ne.s32.totalorder %s98, %s114
      %p116 = scmp.eq.s32.totalorder %s20, 0
      %p117 = por %p115, %p116
      %s118 = ssub.s32 %s21, %s40
      %p119 = scmp.eq.s32.totalorder %s118, 0
      %s121 = sadd.s32 %s120, 1
      %s122 = scalar_select %p119, %s120, %s121
      %p125 = pneg %p119
      %p126 = scmp.eq.s32.totalorder %s14, 7
      %p127 = por %p125, %p126
      %p128 = scmp.ne.s32.totalorder %s120, %s123
      %p129 = scmp.eq.s32.totalorder %s14, 0
      %p130 = por %p128, %p129
      %p131 = scmp.ne.s32.totalorder %s120, %s123
      %p132 = scmp.eq.s32.totalorder %s19, 7
      %p133 = por %p131, %p132
      %p134 = scmp.ne.s32.totalorder %s123, %s124
      %p135 = scmp.eq.s32.totalorder %s19, 0
      %p136 = por %p134, %p135
      %p137 = scmp.ne.s32.totalorder %s123, %s124
      %p138 = scmp.eq.s32.totalorder %s20, 7
      %p139 = por %p137, %p138
      %p141 = scmp.ne.s32.totalorder %s124, %s140
      %p142 = scmp.eq.s32.totalorder %s20, 0
      %p143 = por %p141, %p142
      %p144 = scmp.le.s32.totalorder 1, %s14
      %p145 = scmp.lt.s32.totalorder %s14, 9
      %p146 = pnand %p144, %p145
      %p147 = pneg %p146
      // Predicated region
      $region9: #{frelu.2} parent=5 // pred_check
        _
      $region10: #{frelu.2} parent=5 // pred_check_branch
        %149 = sbr.rel (%p146) target = $region12
      $region11: #{frelu.2} parent=5 // pred_region
        %s150 = ssub.s32 %s14, 1
        // Predicated region
        $region13: #{frelu.2} parent=11 // pred_check
          %p151 = pneg %p84
        $region14: #{frelu.2} parent=11 // pred_check_branch
          %153 = sbr.rel (%p151) target = $region16
        $region15: #{frelu.2} parent=11 // pred_region
          %s155 = ssub.s32 16, 16
          %156 = vsyncadd [#allocation5], %s155
          %s158 = sshll.u32 %s1, 4
          %s159 = int_to_ptr.vmem [resolvable:$true] %s158
          %161 = dma.vmem_to_smem %s159, 16, [#allocation6], [#allocation5]
        $region16: #{frelu.2} parent=11 // pred_fallthru
          _
      $region12: #{frelu.2} parent=5 // pred_fallthru
        _
      %p162 = scmp.lt.s32.totalorder %s14, 8
      // Predicated region
      $region17: #{frelu.2} parent=5 // pred_check
        %p163 = pneg %p162
      $region18: #{frelu.2} parent=5 // pred_check_branch
        %165 = sbr.rel (%p163) target = $region20
      $region19: #{frelu.2} parent=5 // pred_region
        // Predicated region
        $region21: #{frelu.2} parent=19 // pred_check
          %p166 = pneg %p57
        $region22: #{frelu.2} parent=19 // pred_check_branch
          %168 = sbr.rel (%p166) target = $region24
        $region23: #{frelu.2} parent=19 // pred_region
          %s169 = sand.u32 %s47, 1
          %s170 = scalar_lea.sflag [#allocation4], %s169
          %s171 = sand.u32 %s47, 1
          %s172 = smul.addr %s171, 16
          %s173 = scalar_lea.vmem [#allocation3], %s172
          %s174 = sadd.s32 %s21, %s22
          %s176 = ssub.s32 256, 256
          %177 = vsyncadd %s170, %s176
          %s178 = smul.addr %s23, 2
          %s179 = smul.addr %s174, 8
          %s180 = sadd.s32 %s178, %s179
          %s181 = smul.addr %s180, 128
          %s182 = scalar_lea.hbm %s0, %s181
          %s183 = sshll.u32 %s173, 4
          %s184 = int_to_ptr.vmem [resolvable:$true] %s183
          %189 = dma.hbm_to_vmem [thread:$0]  %s182, 256, %s184, %s170, 128, 128, 8
        $region24: #{frelu.2} parent=19 // pred_fallthru
          _
      $region20: #{frelu.2} parent=5 // pred_fallthru
        _
      %p190 = scmp.le.s32.totalorder 1, %s14
      %p191 = scmp.lt.s32.totalorder %s14, 9
      %p192 = pnand %p190, %p191
      %p193 = pneg %p192
      // Predicated region
      $region25: #{frelu.2} parent=5 // pred_check
        _
      $region26: #{frelu.2} parent=5 // pred_check_branch
        %195 = sbr.rel (%p192) target = $region28
      $region27: #{frelu.2} parent=5 // pred_region
        %s196 = ssub.s32 %s14, 1
        %s197 = sand.u32 %s50, 1
        %s198 = scalar_lea.sflag [#allocation4], %s197
        %s199 = sand.u32 %s50, 1
        %s200 = smul.addr %s199, 16
        %s201 = scalar_lea.vmem [#allocation3], %s200
        // Predicated region
        $region29: #{frelu.2} parent=27 // pred_check
          %p202 = pneg %p63
        $region30: #{frelu.2} parent=27 // pred_check_branch
          %204 = sbr.rel (%p202) target = $region32
        $region31: #{frelu.2} parent=27 // pred_region
          %205 = dma.done %s198, 256
        $region32: #{frelu.2} parent=27 // pred_fallthru
          _
        // Predicated region
        $region33: #{frelu.2} parent=27 // pred_check
          %p206 = pneg %p84
        $region34: #{frelu.2} parent=27 // pred_check_branch
          %208 = sbr.rel (%p206) target = $region36
        $region35: #{frelu.2} parent=27 // pred_region
          %209 = dma.done [#allocation5], 16
        $region36: #{frelu.2} parent=27 // pred_fallthru
          _
        %210 = sfence
        %s211 = sand.u32 %s50, 1
        %s212 = scalar_lea.sflag [#allocation4], %s211
        %s213 = sand.u32 %s50, 1
        %s214 = smul.addr %s213, 16
        %s215 = scalar_lea.vmem [#allocation3], %s214
        %p216 = pneg %p63
        %p217 = pneg %p60
        %p218 = pneg %p84
        %p219 = pneg %p81
        %p220 = pneg %p110
        %p221 = pneg %p107
        %p222 = scmp.lt.s32.totalorder %s24, 1
        %s223 = scalar_select %p222, %s24, 1
        %s224 = smul.addr %s223, 8
        %s225 = scalar_lea.vmem %s2, %s224
        %p226 = pneg %p136
        %p227 = pneg %p133
        %p228 = scmp.lt.s32.totalorder %s24, 1
        %s229 = scalar_select %p228, %s24, 1
        %s230 = smul.addr %s229, 8
        %s231 = scalar_lea.vmem %s3, %s230
        %s232 = sadd.s32 %s24, %s25
        %p233 = scmp.lt.s32.totalorder %s24, 1
        %s234 = scalar_select %p233, %s24, 1
        %s235 = smul.addr %s234, 8
        %s236 = scalar_lea.vmem %s2, %s235
        %p237 = scmp.lt.s32.totalorder %s24, 1
        %s238 = scalar_select %p237, %s24, 1
        %s239 = smul.addr %s238, 8
        %s240 = scalar_lea.vmem %s3, %s239
        %p241 = scmp.eq.s32.totalorder %s25, 0
        %p242 = scmp.eq.s32.totalorder %s26, 0
        %p243 = pnand %p241, %p242
        %p244 = pneg %p243
        // Predicated region
        $region37: #{frelu.2} parent=27 // pred_check
          _
        $region38: #{frelu.2} parent=27 // pred_check_branch
          %246 = sbr.rel (%p243) target = $region40
        $region39: #{frelu.2} parent=27 // pred_region
          %vm247 = vcmask 31744
          %248 = vst.msk [vmem:[%s236] sm:$0xff] %vm247, 0.0
          %249 = vst.msk [vmem:[%s240] sm:$0xff] %vm247, 0.0
        $region40: #{frelu.2} parent=27 // pred_fallthru
          _
        %v250 = vld [vmem:[%s201] sm:$0xff]
        %v251 = vld [vmem:[%s201 + $0x8] sm:$0xff]
        %s252 = smul.u32 %s26, 9
        %v253 = vlaneseq
        %vm254 = vcmp.ge.s32.totalorder %v253, 0
        %vm255 = vcmp.lt.s32.totalorder %v253, 145
        %vm256 = vmand %vm254, %vm255
        %s257 = scalar_lea.vmem [#allocation2], 7
        %258 = vst.msk [vmem:[%s257] ss:$8 sm:$0x3] %vm256, 0.0
        %259 = vst.msk [vmem:[%s257] ss:$8 sm:$0x0] %vm256, 0.0
        %s260 = scalar_lea.vmem [#allocation2], 48
        %261 = vst.msk [vmem:[%s260] ss:$8 sm:$0x3] %vm256, 0.0
        %262 = vst.msk [vmem:[%s260] ss:$8 sm:$0x0] %vm256, 0.0
        %vm263 = vcmask 130048
        %264 = vst.msk [vmem:[#allocation2 + $0x18] sm:$0xff] %vm263, %v250
        %265 = vst.msk [vmem:[#allocation2 + $0x28] sm:$0xff] %vm263, %v251
        %s266 = sld [smem:[#allocation6 + %s252]]
        %v267 = vld [vmem:[#allocation2] sm:$0x80]
        %v268 = vld [vmem:[#allocation2 + $0x8] sm:$0x80]
        %v269 = vld [vmem:[#allocation2 + $0x10] sm:$0xff]
        %v270 = vld [vmem:[#allocation2 + $0x18] sm:$0xff]
        %v271 = vld [vmem:[#allocation2 + $0x20] sm:$0x7f]
        %v272 = vld [vmem:[#allocation2 + $0x28] sm:$0x7f]
        %v273 = vstv %s266
        %v274 = vmul.f32 %v273, %v267
        %v275 = vmul.f32 %v273, %v268
        %v276 = vmul.f32 %v273, %v269
        %v277 = vmul.f32 %v273, %v270
        %v278 = vmul.f32 %v273, %v271
        %v279 = vmul.f32 %v273, %v272
        %s280 = sadd.s32 %s252, 3
        %s281 = sld [smem:[#allocation6 + %s280]]
        %v282 = vld [vmem:[#allocation2 + $0x20] sm:$0xff]
        %v283 = vld [vmem:[#allocation2 + $0x28] sm:$0xff]
        %v284 = vstv %s281
        %v285 = vmul.f32 %v284, %v269
        %v286 = vmul.f32 %v284, %v270
        %v287 = vmul.f32 %v284, %v282
        %v288 = vmul.f32 %v284, %v283
        %vm293 = vcmask 1046528
        %v294 = vrot.slane %v285, 1
        %v295 = vrot.slane %v286, 1
        %v296 = vrot.slane %v287, 1
        %v297 = vsel %vm293, %v294, %v296
        %v298 = vrot.slane %v288, 1
        %v299 = vsel %vm293, %v295, %v298
        %v306 = vadd.f32 %v274, %v294
        %v307 = vadd.f32 %v275, %v295
        %v308 = vadd.f32 %v276, %v297
        %v309 = vadd.f32 %v277, %v299
        %v310 = vadd.f32 %v278, %v296
        %v311 = vadd.f32 %v279, %v298
        %s312 = sadd.s32 %s252, 6
        %s313 = sld [smem:[#allocation6 + %s312]]
        %v314 = vld [vmem:[#allocation2 + $0x10] sm:$0xfe]
        %v315 = vld [vmem:[#allocation2 + $0x18] sm:$0xfe]
        %v316 = vld [vmem:[#allocation2 + $0x20] sm:$0xff]
        %v317 = vld [vmem:[#allocation2 + $0x28] sm:$0xff]
        %v318 = vld [vmem:[#allocation2 + $0x30] sm:$0x1]
        %v319 = vld [vmem:[#allocation2 + $0x38] sm:$0x1]
        %v320 = vstv %s313
        %v321 = vmul.f32 %v320, %v314
        %v322 = vmul.f32 %v320, %v315
        %v323 = vmul.f32 %v320, %v316
        %v324 = vmul.f32 %v320, %v317
        %v325 = vmul.f32 %v320, %v318
        %v326 = vmul.f32 %v320, %v319
        %vm333 = vcmask 1045504
        %v334 = vrot.slane %v321, 2
        %v335 = vrot.slane %v322, 2
        %v336 = vrot.slane %v323, 2
        %v337 = vsel %vm333, %v334, %v336
        %v338 = vrot.slane %v324, 2
        %v339 = vsel %vm333, %v335, %v338
        %v340 = vrot.slane %v325, 2
        %v341 = vsel %vm333, %v336, %v340
        %v342 = vrot.slane %v326, 2
        %v343 = vsel %vm333, %v338, %v342
        %v350 = vadd.f32 %v306, %v334
        %v351 = vadd.f32 %v307, %v335
        %v352 = vadd.f32 %v308, %v337
        %v353 = vadd.f32 %v309, %v339
        %v354 = vadd.f32 %v310, %v341
        %v355 = vadd.f32 %v311, %v343
        %s356 = sadd.s32 %s252, 1
        %s357 = sld [smem:[#allocation6 + %s356]]
        %v358 = vstv %s357
        %v359 = vmul.f32 %v358, %v268
        %v360 = vmul.f32 %v358, %v270
        %v361 = vmul.f32 %v358, %v272
        %s362 = sadd.s32 %s252, 4
        %s363 = sld [smem:[#allocation6 + %s362]]
        %v364 = vstv %s363
        %v365 = vmul.f32 %v364, %v250
        %v366 = vmul.f32 %v364, %v251
        %v369 = vrot.slane %v365, 1
        %v370 = vrot.slane %v366, 1
        %v371 = vsel %vm293, %v369, %v370
        %v375 = vadd.f32 %v359, %v369
        %v376 = vadd.f32 %v360, %v371
        %v377 = vadd.f32 %v361, %v370
        %s378 = sadd.s32 %s252, 7
        %s379 = sld [smem:[#allocation6 + %s378]]
        %v380 = vstv %s379
        %v381 = vmul.f32 %v380, %v315
        %v382 = vmul.f32 %v380, %v317
        %v383 = vmul.f32 %v380, %v319
        %v387 = vrot.slane %v381, 2
        %v388 = vrot.slane %v382, 2
        %v389 = vsel %vm333, %v387, %v388
        %v390 = vrot.slane %v383, 2
        %v391 = vsel %vm333, %v388, %v390
        %v395 = vadd.f32 %v375, %v387
        %v396 = vadd.f32 %v376, %v389
        %v397 = vadd.f32 %v377, %v391
        %s398 = sadd.s32 %s252, 2
        %s399 = sld [smem:[#allocation6 + %s398]]
        %v400 = vstv %s399
        %v401 = vmul.f32 %v400, %v268
        %v402 = vmul.f32 %v400, %v270
        %v403 = vmul.f32 %v400, %v272
        %s404 = sadd.s32 %s252, 5
        %s405 = sld [smem:[#allocation6 + %s404]]
        %v406 = vstv %s405
        %v407 = vmul.f32 %v406, %v270
        %v408 = vmul.f32 %v406, %v283
        %v411 = vrot.slane %v407, 1
        %v412 = vrot.slane %v408, 1
        %v413 = vsel %vm293, %v411, %v412
        %v417 = vadd.f32 %v401, %v411
        %v418 = vadd.f32 %v402, %v413
        %v419 = vadd.f32 %v403, %v412
        %s420 = sadd.s32 %s252, 8
        %s421 = sld [smem:[#allocation6 + %s420]]
        %v422 = vstv %s421
        %v423 = vmul.f32 %v422, %v315
        %v424 = vmul.f32 %v422, %v317
        %v425 = vmul.f32 %v422, %v319
        %v429 = vrot.slane %v423, 2
        %v430 = vrot.slane %v424, 2
        %v431 = vsel %vm333, %v429, %v430
        %v432 = vrot.slane %v425, 2
        %v433 = vsel %vm333, %v430, %v432
        %v437 = vadd.f32 %v417, %v429
        %v438 = vadd.f32 %v418, %v431
        %v439 = vadd.f32 %v419, %v433
        %v440 = vlaneseq
        %v441 = vand.u32 %v440, 127
        %vm442 = vcmp.gt.s32.totalorder %v441, 0
        %v443 = vsel %vm442, 1, 0
        %vm444 = vcmp.eq.s32.totalorder %v443, 1
        %vm451 = vcmask 1040384
        %v452 = vrot.slane %v350, 7
        %v453 = vrot.slane %v352, 7
        %v454 = vsel %vm451, %v452, %v453
        %v455 = vrot.slane %v351, 7
        %v456 = vrot.slane %v353, 7
        %v457 = vsel %vm451, %v455, %v456
        %v458 = vrot.slane %v354, 7
        %v459 = vsel %vm451, %v453, %v458
        %v460 = vrot.slane %v355, 7
        %v461 = vsel %vm451, %v456, %v460
        %462 = vrot.lane.b32.xlu0 %v454, 1
        %v463 = vpop.permute.xlu0 %462
        %464 = vrot.lane.b32.xlu0 %v457, 1
        %v465 = vpop.permute.xlu0 %464
        %466 = vrot.lane.b32.xlu0 %v459, 1
        %v467 = vpop.permute.xlu0 %466
        %468 = vrot.lane.b32.xlu0 %v461, 1
        %v469 = vpop.permute.xlu0 %468
        %vm470 = vcmask 7168
        %v471 = vsel %vm470, %v463, %v465
        %v472 = vsel %vm470, %v467, %v469
        %v475 = vsel %vm444, %v471, 0.0
        %v476 = vsel %vm444, %v472, 0.0
        %vm477 = vcmp.lt.s32.totalorder %v441, 15
        %v478 = vsel %vm477, 1, 0
        %vm479 = vcmp.eq.s32.totalorder %v478, 1
        %v483 = vrot.slane %v437, 7
        %v484 = vrot.slane %v438, 7
        %v485 = vsel %vm451, %v483, %v484
        %v486 = vrot.slane %v439, 7
        %v487 = vsel %vm451, %v484, %v486
        %488 = vrot.lane.b32.xlu0 %v485, 127
        %v489 = vpop.permute.xlu0 %488
        %490 = vrot.lane.b32.xlu0 %v487, 127
        %v491 = vpop.permute.xlu0 %490
        %v494 = vsel %vm479, %v489, 0.0
        %v495 = vsel %vm479, %v491, 0.0
        %v499 = vrot.slane %v395, 7
        %v500 = vrot.slane %v396, 7
        %v501 = vsel %vm451, %v499, %v500
        %v502 = vrot.slane %v397, 7
        %v503 = vsel %vm451, %v500, %v502
        %v506 = vadd.f32 %v475, %v501
        %v507 = vadd.f32 %v476, %v503
        %v508 = vadd.f32 %v506, %v494
        %v509 = vadd.f32 %v507, %v495
        %v510 = vadd.f32 %v508, 0.0
        %v511 = vadd.f32 %v509, 0.0
        %v512 = vsel %vm263, %v510, 0.0
        %v513 = vsel %vm263, %v511, 0.0
        %v514 = vadd.f32 %v512, %v513
        %515 = vadd.xlane.f32.xlu0 %v514
        %v516 = vpop.xlane.xlu0 %515
        %v517 = vrot.slane %v516, 4
        %v518 = vadd.f32 %v516, %v517
        %v519 = vrot.slane %v518, 2
        %v520 = vadd.f32 %v518, %v519
        %v521 = vrot.slane %v520, 1
        %v522 = vadd.f32 %v520, %v521
        %s523 = vtos %v522
        %v524 = vmul.f32 %v508, %v508
        %v525 = vmul.f32 %v509, %v509
        %v526 = vadd.f32 %v524, 0.0
        %v527 = vadd.f32 %v525, 0.0
        %v528 = vsel %vm263, %v526, 0.0
        %v529 = vsel %vm263, %v527, 0.0
        %v530 = vadd.f32 %v528, %v529
        %531 = vadd.xlane.f32.xlu0 %v530
        %v532 = vpop.xlane.xlu0 %531
        %v533 = vrot.slane %v532, 4
        %v534 = vadd.f32 %v532, %v533
        %v535 = vrot.slane %v534, 2
        %v536 = vadd.f32 %v534, %v535
        %v537 = vrot.slane %v536, 1
        %v538 = vadd.f32 %v536, %v537
        %s539 = vtos %v538
        %v540 = vstv %s26
        %vm541 = vcmp.eq.s32.totalorder %v441, %v540
        %v542 = vsel %vm541, 1, 0
        %v543 = vcvt.s32.f32 %v542
        %v544 = vld [vmem:[%s236] sm:$0x1]
        %v545 = vstv %s523
        %v546 = vmul.f32 %v545, %v543
        %v547 = vadd.f32 %v544, %v546
        %vm548 = vcmask 24576
        %549 = vst.msk [vmem:[%s236] sm:$0x1] %vm548, %v547
        %v550 = vld [vmem:[%s240] sm:$0x1]
        %v551 = vstv %s539
        %v552 = vmul.f32 %v551, %v543
        %v553 = vadd.f32 %v550, %v552
        %554 = vst.msk [vmem:[%s240] sm:$0x1] %vm548, %v553
        %p555 = scmp.lt.s32.totalorder %s24, 1
        %s556 = scalar_select %p555, %s24, 1
        %s557 = smul.addr %s556, 8
        %s558 = scalar_lea.vmem %s2, %s557
        %p559 = scmp.lt.s32.totalorder %s24, 1
        %s560 = scalar_select %p559, %s24, 1
        %s561 = smul.addr %s560, 8
        %s562 = scalar_lea.vmem %s3, %s561
        // Predicated region
        $region41: #{frelu.2} parent=27 // pred_check
          %p563 = pneg %p107
        $region42: #{frelu.2} parent=27 // pred_check_branch
          %565 = sbr.rel (%p563) target = $region44
        $region43: #{frelu.2} parent=27 // pred_region
          _
        $region44: #{frelu.2} parent=27 // pred_fallthru
          _
        // Predicated region
        $region45: #{frelu.2} parent=27 // pred_check
          %p566 = pneg %p133
        $region46: #{frelu.2} parent=27 // pred_check_branch
          %568 = sbr.rel (%p566) target = $region48
        $region47: #{frelu.2} parent=27 // pred_region
          _
        $region48: #{frelu.2} parent=27 // pred_fallthru
          _
      $region28: #{frelu.2} parent=5 // pred_fallthru
        _
      %p569 = scmp.le.s32.totalorder 2, %s14
      // Predicated region
      $region49: #{frelu.2} parent=5 // pred_check
        %p570 = pneg %p569
      $region50: #{frelu.2} parent=5 // pred_check_branch
        %572 = sbr.rel (%p570) target = $region52
      $region51: #{frelu.2} parent=5 // pred_region
        %s573 = ssub.s32 %s14, 2
        // Predicated region
        $region53: #{frelu.2} parent=51 // pred_check
          %p574 = pneg %p113
        $region54: #{frelu.2} parent=51 // pred_check_branch
          %576 = sbr.rel (%p574) target = $region56
        $region55: #{frelu.2} parent=51 // pred_region
          %p577 = scmp.lt.s32.totalorder %s27, 1
          %s578 = scalar_select %p577, %s27, 1
          %s579 = smul.addr %s578, 8
          %s580 = scalar_lea.vmem %s2, %s579
        $region56: #{frelu.2} parent=51 // pred_fallthru
          _
        // Predicated region
        $region57: #{frelu.2} parent=51 // pred_check
          %p581 = pneg %p139
        $region58: #{frelu.2} parent=51 // pred_check_branch
          %583 = sbr.rel (%p581) target = $region60
        $region59: #{frelu.2} parent=51 // pred_region
          %p584 = scmp.lt.s32.totalorder %s27, 1
          %s585 = scalar_select %p584, %s27, 1
          %s586 = smul.addr %s585, 8
          %s587 = scalar_lea.vmem %s3, %s586
        $region60: #{frelu.2} parent=51 // pred_fallthru
          _
      $region52: #{frelu.2} parent=5 // pred_fallthru
        _
    $region6: #{frelu.2} parent=1 // loop_footer
      %s18 = sadd.s32 1, %s14
    $region7: #{frelu.2} parent=1 // loop_footer_branch
      %13 = sbr.rel target = $region3
    $region8: #{frelu.2} parent=1 // loop_exit
      _
    %588 = vsyncpa [#allocation4], 1
    %s589 = scalar_lea.sflag [#allocation4], 1
    %590 = vsyncpa %s589, 1
    %591 = vsyncpa [#allocation5], 1
    %s592 = scalar_lea.sflag [#allocation5], 1
    %593 = vsyncpa %s592, 1

// kernel: frelu.3
$region0: #{frelu.3}
  #allocation0 [shape = 'u32[]', space=smem, size = 0x4, offset = 0x4, fixed_abs, tag = 'smem constant byte address 0x4 - core index']
  #allocation1 [shape = 'u32[144,128]{1,0:T(1,128)}', space=vmem, size = 0x12000, scoped, tag = 'internal scratch']
  #allocation2 [shape = 'f32[2,25,145]{2,1,0:T(8,128)}', space=vmem, size = 0x10000, scoped, tag = 'scratch operand']
  #allocation11 [shape = 's32[]', space=sflag, size = 0x4, offset = 0, fixed_abs, tag = 'sflag constant byte address 0x0 - dummy sync flag']
  %s0 = inlined_call_operand.vmem [shape: f32[2,4,16,16], index: 0, kind: input, shape index: {}]
  %s1 = inlined_call_operand.vmem [shape: f32[36], index: 1, kind: input, shape index: {}]
  %s2 = inlined_call_operand.vmem [shape: f32[4], index: 2, kind: input, shape index: {}]
  %s3 = inlined_call_operand.vmem [shape: f32[4], index: 3, kind: input, shape index: {}]
  %s4 = inlined_call_operand.hbm [shape: f32[2,4,16,16], index: 4, kind: output, shape index: {}]
  %s5 = sld [smem:[#allocation0]]
  $region99: #{frelu.3} parent=0
    _
  %s7 = ssub.s32 1, %s5
  %s8 = scalar_select 0, %s7, %s5
  $region1: #{frelu.3} parent=0
    #allocation3 [shape = 'u8[32768]{0}', space=vmem, size = 0x8000, scoped, tag = 'input window, operand 0']
    #allocation4 [shape = 'u8[512]{0}', space=smem, size = 0x200, scoped, tag = 'input window, operand 1, single buffered']
    #allocation5 [shape = 's32[2]{0}', space=sflag, size = 0x8, scoped, tag = 'scoped memory for frelu.3']
    #allocation6 [shape = 's32[2]{0}', space=sflag, size = 0x8, scoped, tag = 'scoped memory for frelu.3']
    #allocation7 [shape = 'u8[512]{0}', space=smem, size = 0x200, scoped, tag = 'input window, operand 2, single buffered']
    #allocation8 [shape = 's32[1]{0}', space=sflag, size = 0x4, scoped, tag = 'scoped memory for frelu.3']
    #allocation9 [shape = 'u8[512]{0}', space=smem, size = 0x200, scoped, tag = 'input window, operand 3, single buffered']
    #allocation10 [shape = 'u8[32768]{0}', space=vmem, size = 0x8000, scoped, tag = 'output window, operand 0']
    %9 = vsyncpa [#allocation6], 0
    %10 = vsyncpa [#allocation8], 0
    %11 = vsyncpa [#allocation5], 0
    %s12 = scalar_lea.sflag [#allocation5], 1
    %13 = vsyncpa %s12, 0
    loop: start=0, step=1, limit=6
    $region2: #{frelu.3} parent=1 // loop_pre_header
      _
    $region3: #{frelu.3} parent=1 // loop_header
      %s15 = sphi 0, %s19
      %p16 = scmp.ge.s32.totalorder %s15, 6
      %s22 = sphi 0, %s34
      %s23 = sphi 0, %s30
      %s24 = sphi 0, %s22
      %s25 = sphi 0, %s23
      %s26 = sphi 0, %s24
      %s27 = sphi 0, %s25
      %s39 = sphi 0, %s41
      %s42 = sphi 0, %s39
      %s43 = sphi 0, %s42
      %s59 = sphi 0, %s43
      %s63 = sphi 0, %s63
      %s65 = sphi 0, %s63
      %s66 = sphi 0, %s65
      %s80 = sphi 0, %s66
      %s84 = sphi 0, %s84
      %s86 = sphi 0, %s84
      %s87 = sphi 0, %s86
      %s101 = sphi 0, %s87
      %s105 = sphi 0, %s105
      %s107 = sphi 0, %s105
      %s108 = sphi 0, %s107
      %s122 = sphi 0, %s108
      %s130 = sphi 0, %s132
      %s133 = sphi 0, %s130
      %s134 = sphi 0, %s133
      %s150 = sphi 0, %s134
    $region4: #{frelu.3} parent=1 // loop_header_branch
      %18 = sbr.rel (%p16) target = $region8
    $region5: #{frelu.3} parent=1 // loop_body
      %s20 = ssub.s32 %s15, 1
      %s21 = ssub.s32 %s15, 2
      %s28 = sadd.s32 1, %s23
      %p29 = scmp.ge.s32.totalorder %s28, 4
      %s30 = scalar_select %p29, 0, %s28
      %s31 = sadd.s32 1, %s22
      %s32 = scalar_select %p29, %s31, %s22
      %p33 = scmp.ge.s32.totalorder %s32, 1
      %s34 = scalar_select %p33, 0, %s32
      %s35 = ssub.s32 %s22, %s34
      %s36 = ssub.s32 %s23, %s30
      %s37 = sor.u32 %s35, %s36
      %p38 = scmp.eq.s32.totalorder %s37, 0
      %s40 = sadd.s32 %s39, 1
      %s41 = scalar_select %p38, %s39, %s40
      %p44 = pneg %p38
      %p45 = scmp.eq.s32.totalorder %s15, 3
      %p46 = por %p44, %p45
      %p47 = scmp.ne.s32.totalorder %s39, %s42
      %p48 = scmp.eq.s32.totalorder %s15, 0
      %p49 = por %p47, %p48
      %p50 = scmp.ne.s32.totalorder %s39, %s42
      %p51 = scmp.eq.s32.totalorder %s20, 3
      %p52 = por %p50, %p51
      %p53 = scmp.ne.s32.totalorder %s42, %s43
      %p54 = scmp.eq.s32.totalorder %s20, 0
      %p55 = por %p53, %p54
      %p56 = scmp.ne.s32.totalorder %s42, %s43
      %p57 = scmp.eq.s32.totalorder %s21, 3
      %p58 = por %p56, %p57
      %p60 = scmp.ne.s32.totalorder %s43, %s59
      %p61 = scmp.eq.s32.totalorder %s21, 0
      %p62 = por %p60, %p61
      %s64 = sadd.s32 %s63, 1
      %p67 = scmp.eq.s32.totalorder %s15, 3
      %p68 = scmp.ne.s32.totalorder %s63, %s65
      %p69 = scmp.eq.s32.totalorder %s15, 0
      %p70 = por %p68, %p69
      %p71 = scmp.ne.s32.totalorder %s63, %s65
      %p72 = scmp.eq.s32.totalorder %s20, 3
      %p73 = por %p71, %p72
      %p74 = scmp.ne.s32.totalorder %s65, %s66
      %p75 = scmp.eq.s32.totalorder %s20, 0
      %p76 = por %p74, %p75
      %p77 = scmp.ne.s32.totalorder %s65, %s66
      %p78 = scmp.eq.s32.totalorder %s21, 3
      %p79 = por %p77, %p78
      %p81 = scmp.ne.s32.totalorder %s66, %s80
      %p82 = scmp.eq.s32.totalorder %s21, 0
      %p83 = por %p81, %p82
      %s85 = sadd.s32 %s84, 1
      %p88 = scmp.eq.s32.totalorder %s15, 3
      %p89 = scmp.ne.s32.totalorder %s84, %s86
      %p90 = scmp.eq.s32.totalorder %s15, 0
      %p91 = por %p89, %p90
      %p92 = scmp.ne.s32.totalorder %s84, %s86
      %p93 = scmp.eq.s32.totalorder %s20, 3
      %p94 = por %p92, %p93
      %p95 = scmp.ne.s32.totalorder %s86, %s87
      %p96 = scmp.eq.s32.totalorder %s20, 0
      %p97 = por %p95, %p96
      %p98 = scmp.ne.s32.totalorder %s86, %s87
      %p99 = scmp.eq.s32.totalorder %s21, 3
      %p100 = por %p98, %p99
      %p102 = scmp.ne.s32.totalorder %s87, %s101
      %p103 = scmp.eq.s32.totalorder %s21, 0
      %p104 = por %p102, %p103
      %s106 = sadd.s32 %s105, 1
      %p109 = scmp.eq.s32.totalorder %s15, 3
      %p110 = scmp.ne.s32.totalorder %s105, %s107
      %p111 = scmp.eq.s32.totalorder %s15, 0
      %p112 = por %p110, %p111
      %p113 = scmp.ne.s32.totalorder %s105, %s107
      %p114 = scmp.eq.s32.totalorder %s20, 3
      %p115 = por %p113, %p114
      %p116 = scmp.ne.s32.totalorder %s107, %s108
      %p117 = scmp.eq.s32.totalorder %s20, 0
      %p118 = por %p116, %p117
      %p119 = scmp.ne.s32.totalorder %s107, %s108
      %p120 = scmp.eq.s32.totalorder %s21, 3
      %p121 = por %p119, %p120
      %p123 = scmp.ne.s32.totalorder %s108, %s122
      %p124 = scmp.eq.s32.totalorder %s21, 0
      %p125 = por %p123, %p124
      %s126 = ssub.s32 %s22, %s34
      %s127 = ssub.s32 %s23, %s30
      %s128 = sor.u32 %s126, %s127
      %p129 = scmp.eq.s32.totalorder %s128, 0
      %s131 = sadd.s32 %s130, 1
      %s132 = scalar_select %p129, %s130, %s131
      %p135 = pneg %p129
      %p136 = scmp.eq.s32.totalorder %s15, 3
      %p137 = por %p135, %p136
      %p138 = scmp.ne.s32.totalorder %s130, %s133
      %p139 = scmp.eq.s32.totalorder %s15, 0
      %p140 = por %p138, %p139
      %p141 = scmp.ne.s32.totalorder %s130, %s133
      %p142 = scmp.eq.s32.totalorder %s20, 3
      %p143 = por %p141, %p142
      %p144 = scmp.ne.s32.totalorder %s133, %s134
      %p145 = scmp.eq.s32.totalorder %s20, 0
      %p146 = por %p144, %p145
      %p147 = scmp.ne.s32.totalorder %s133, %s134
      %p148 = scmp.eq.s32.totalorder %s21, 3
      %p149 = por %p147, %p148
      %p151 = scmp.ne.s32.totalorder %s134, %s150
      %p152 = scmp.eq.s32.totalorder %s21, 0
      %p153 = por %p151, %p152
      %p154 = scmp.le.s32.totalorder 1, %s15
      %p155 = scmp.lt.s32.totalorder %s15, 5
      %p156 = pnand %p154, %p155
      %p157 = pneg %p156
      // Predicated region
      $region9: #{frelu.3} parent=5 // pred_check
        _
      $region10: #{frelu.3} parent=5 // pred_check_branch
        %159 = sbr.rel (%p156) target = $region12
      $region11: #{frelu.3} parent=5 // pred_region
        %s160 = ssub.s32 %s15, 1
        // Predicated region
        $region13: #{frelu.3} parent=11 // pred_check
          %p161 = pneg %p76
        $region14: #{frelu.3} parent=11 // pred_check_branch
          %163 = sbr.rel (%p161) target = $region16
        $region15: #{frelu.3} parent=11 // pred_region
          %s165 = ssub.s32 16, 16
          %166 = vsyncadd [#allocation6], %s165
          %s168 = sshll.u32 %s1, 4
          %s169 = int_to_ptr.vmem [resolvable:$true] %s168
          %171 = dma.vmem_to_smem %s169, 16, [#allocation4], [#allocation6]
        $region16: #{frelu.3} parent=11 // pred_fallthru
          _
        // Predicated region
        $region17: #{frelu.3} parent=11 // pred_check
          %p172 = pneg %p97
        $region18: #{frelu.3} parent=11 // pred_check_branch
          %174 = sbr.rel (%p172) target = $region20
        $region19: #{frelu.3} parent=11 // pred_region
          %s176 = ssub.s32 16, 16
          %177 = vsyncadd [#allocation8], %s176
          %s179 = sshll.u32 %s2, 4
          %s180 = int_to_ptr.vmem [resolvable:$true] %s179
          %182 = dma.vmem_to_smem %s180, 16, [#allocation7], [#allocation8]
        $region20: #{frelu.3} parent=11 // pred_fallthru
          _
        // Predicated region
        $region21: #{frelu.3} parent=11 // pred_check
          %p183 = pneg %p118
        $region22: #{frelu.3} parent=11 // pred_check_branch
          %185 = sbr.rel (%p183) target = $region24
        $region23: #{frelu.3} parent=11 // pred_region
          %s187 = ssub.s32 16, 16
          %188 = vsyncadd [#allocation8], %s187
          %s190 = sshll.u32 %s3, 4
          %s191 = int_to_ptr.vmem [resolvable:$true] %s190
          %193 = dma.vmem_to_smem %s191, 16, [#allocation9], [#allocation8]
        $region24: #{frelu.3} parent=11 // pred_fallthru
          _
      $region12: #{frelu.3} parent=5 // pred_fallthru
        _
      %p194 = scmp.lt.s32.totalorder %s15, 4
      // Predicated region
      $region25: #{frelu.3} parent=5 // pred_check
        %p195 = pneg %p194
      $region26: #{frelu.3} parent=5 // pred_check_branch
        %197 = sbr.rel (%p195) target = $region28
      $region27: #{frelu.3} parent=5 // pred_region
        // Predicated region
        $region29: #{frelu.3} parent=27 // pred_check
          %p198 = pneg %p49
        $region30: #{frelu.3} parent=27 // pred_check_branch
          %200 = sbr.rel (%p198) target = $region32
        $region31: #{frelu.3} parent=27 // pred_region
          %s201 = sand.u32 %s39, 1
          %s202 = sand.u32 %s39, 1
          %s203 = smul.addr %s202, 32
          %s204 = scalar_lea.vmem [#allocation3], %s203
          %s205 = smul.u32 2, %s22
          %s206 = smul.addr %s23, 2
          %s207 = smul.addr %s205, 8
          %s208 = sadd.s32 %s206, %s207
          %s209 = smul.addr %s208, 8
          %s210 = scalar_lea.vmem %s0, %s209
          // Predicated region
          $region33: #{frelu.3} parent=31 // pred_check
            _
          $region34: #{frelu.3} parent=31 // pred_check_branch
            %212 = sbr.rel (0) target = $region36
          $region35: #{frelu.3} parent=31 // pred_region
            // Predicated region
            $region37: #{frelu.3} parent=35 // pred_check
              _
            $region38: #{frelu.3} parent=35 // pred_check_branch
              %214 = sbr.rel (0) target = $region40
            $region39: #{frelu.3} parent=35 // pred_region
              // Predicated region
              $region52: #{frelu.3} parent=39 // pred_check
                _
              $region53: #{frelu.3} parent=39 // pred_check_branch
                %235 = sbr.rel (0) target = $region55
              $region54: #{frelu.3} parent=39 // pred_region
                loop: start=0, step=1, limit=1
                $region56: #{frelu.3} parent=54 // loop_pre_header
                  _
                $region57: #{frelu.3} parent=54 // loop_header
                  %s237 = sphi 0, %s241
                  %p238 = scmp.ge.s32.totalorder %s237, 1
                  %s242 = sphi %s210, %s210
                  %s243 = sphi %s204, %s204
                $region58: #{frelu.3} parent=54 // loop_header_branch
                  %240 = sbr.rel (%p238) target = $region62
                $region59: #{frelu.3} parent=54 // loop_body
                  %v244 = vld [vmem:[%s242] sm:$0xff]
                  %245 = vst [vmem:[%s243] sm:$0xff] %v244
                  %v246 = vld [vmem:[%s242 + $0x8] sm:$0xff]
                  %247 = vst [vmem:[%s243 + $0x8] sm:$0xff] %v246
                  %v248 = vld [vmem:[%s242 + $0x40] sm:$0xff]
                  %249 = vst [vmem:[%s243 + $0x10] sm:$0xff] %v248
                  %v250 = vld [vmem:[%s242 + $0x48] sm:$0xff]
                  %251 = vst [vmem:[%s243 + $0x18] sm:$0xff] %v250
                $region60: #{frelu.3} parent=54 // loop_footer
                  %s241 = sadd.s32 1, %s237
                $region61: #{frelu.3} parent=54 // loop_footer_branch
                  %236 = sbr.rel target = $region57
                $region62: #{frelu.3} parent=54 // loop_exit
                  _
              $region55: #{frelu.3} parent=39 // pred_fallthru
                _
              // Predicated region
              $region63: #{frelu.3} parent=39 // pred_check
                _
              $region64: #{frelu.3} parent=39 // pred_check_branch
                %253 = sbr.rel target = $region66
              $region65: #{frelu.3} parent=39 // pred_region
                _
              $region66: #{frelu.3} parent=39 // pred_fallthru
                _
            $region40: #{frelu.3} parent=35 // pred_fallthru
              _
            // Predicated region
            $region41: #{frelu.3} parent=35 // pred_check
              _
            $region42: #{frelu.3} parent=35 // pred_check_branch
              %216 = sbr.rel target = $region44
            $region43: #{frelu.3} parent=35 // pred_region
              loop: start=0, step=1, limit=1
              $region45: #{frelu.3} parent=43 // loop_pre_header
                _
              $region46: #{frelu.3} parent=43 // loop_header
                %s219 = sphi 0, %s223
                %p220 = scmp.ge.s32.totalorder %s219, 1
                %s224 = sphi %s210, %s210
                %s225 = sphi %s204, %s204
              $region47: #{frelu.3} parent=43 // loop_header_branch
                %222 = sbr.rel (%p220) target = $region51
              $region48: #{frelu.3} parent=43 // loop_body
                %v226 = vld [vmem:[%s224] sm:$0xff]
                %227 = vst [vmem:[%s225] sm:$0xff] %v226
                %v228 = vld [vmem:[%s224 + $0x8] sm:$0xff]
                %229 = vst [vmem:[%s225 + $0x8] sm:$0xff] %v228
                %v230 = vld [vmem:[%s224 + $0x40] sm:$0xff]
                %231 = vst [vmem:[%s225 + $0x10] sm:$0xff] %v230
                %v232 = vld [vmem:[%s224 + $0x48] sm:$0xff]
                %233 = vst [vmem:[%s225 + $0x18] sm:$0xff] %v232
              $region49: #{frelu.3} parent=43 // loop_footer
                %s223 = sadd.s32 1, %s219
              $region50: #{frelu.3} parent=43 // loop_footer_branch
                %218 = sbr.rel target = $region46
              $region51: #{frelu.3} parent=43 // loop_exit
                _
            $region44: #{frelu.3} parent=35 // pred_fallthru
              _
          $region36: #{frelu.3} parent=31 // pred_fallthru
            _
          %254 = vnop
        $region32: #{frelu.3} parent=27 // pred_fallthru
          _
      $region28: #{frelu.3} parent=5 // pred_fallthru
        _
      %p255 = scmp.le.s32.totalorder 1, %s15
      %p256 = scmp.lt.s32.totalorder %s15, 5
      %p257 = pnand %p255, %p256
      %p258 = pneg %p257
      // Predicated region
      $region67: #{frelu.3} parent=5 // pred_check
        _
      $region68: #{frelu.3} parent=5 // pred_check_branch
        %260 = sbr.rel (%p257) target = $region70
      $region69: #{frelu.3} parent=5 // pred_region
        %s261 = ssub.s32 %s15, 1
        %s262 = sand.u32 %s42, 1
        %s263 = sand.u32 %s42, 1
        %s264 = smul.addr %s263, 32
        %s265 = scalar_lea.vmem [#allocation3], %s264
        // Predicated region
        $region71: #{frelu.3} parent=69 // pred_check
          %p266 = pneg %p55
        $region72: #{frelu.3} parent=69 // pred_check_branch
          %268 = sbr.rel (%p266) target = $region74
        $region73: #{frelu.3} parent=69 // pred_region
          _
        $region74: #{frelu.3} parent=69 // pred_fallthru
          _
        // Predicated region
        $region75: #{frelu.3} parent=69 // pred_check
          %p269 = pneg %p76
        $region76: #{frelu.3} parent=69 // pred_check_branch
          %271 = sbr.rel (%p269) target = $region78
        $region77: #{frelu.3} parent=69 // pred_region
          %272 = dma.done [#allocation6], 16
        $region78: #{frelu.3} parent=69 // pred_fallthru
          _
        // Predicated region
        $region79: #{frelu.3} parent=69 // pred_check
          %p273 = pneg %p97
        $region80: #{frelu.3} parent=69 // pred_check_branch
          %275 = sbr.rel (%p273) target = $region82
        $region81: #{frelu.3} parent=69 // pred_region
          %276 = dma.done [#allocation8], 16
        $region82: #{frelu.3} parent=69 // pred_fallthru
          _
        // Predicated region
        $region83: #{frelu.3} parent=69 // pred_check
          %p277 = pneg %p118
        $region84: #{frelu.3} parent=69 // pred_check_branch
          %279 = sbr.rel (%p277) target = $region86
        $region85: #{frelu.3} parent=69 // pred_region
          %280 = dma.done [#allocation8], 16
        $region86: #{frelu.3} parent=69 // pred_fallthru
          _
        %281 = sfence
        %s282 = sand.u32 %s42, 1
        %s283 = sand.u32 %s42, 1
        %s284 = smul.addr %s283, 32
        %s285 = scalar_lea.vmem [#allocation3], %s284
        %p286 = pneg %p55
        %p287 = pneg %p52
        %p288 = pneg %p76
        %p289 = pneg %p73
        %p290 = pneg %p97
        %p291 = pneg %p94
        %p292 = pneg %p118
        %p293 = pneg %p115
        %p294 = pneg %p146
        %p295 = pneg %p143
        %s296 = sand.u32 %s133, 1
        %s297 = scalar_lea.sflag [#allocation5], %s296
        %s298 = sand.u32 %s133, 1
        %s299 = smul.addr %s298, 32
        %s300 = scalar_lea.vmem [#allocation10], %s299
        %s301 = smul.u32 2, %s24
        %s302 = smul.u32 2, %s24
        %v303 = vld [vmem:[%s265] sm:$0xff]
        %v304 = vld [vmem:[%s265 + $0x8] sm:$0xff]
        %v305 = vld [vmem:[%s265 + $0x10] sm:$0xff]
        %v306 = vld [vmem:[%s265 + $0x18] sm:$0xff]
        %s307 = smul.u32 %s25, 9
        %v308 = vlaneseq
        %vm309 = vcmp.ge.s32.totalorder %v308, 0
        %vm310 = vcmp.lt.s32.totalorder %v308, 145
        %vm311 = vmand %vm309, %vm310
        %s312 = scalar_lea.vmem [#allocation2], 7
        %313 = vst.msk [vmem:[%s312] ss:$8 sm:$0x3] %vm311, 0.0
        %314 = vst.msk [vmem:[%s312] ss:$8 sm:$0x0] %vm311, 0.0
        %s315 = scalar_lea.vmem [#allocation2], 71
        %316 = vst.msk [vmem:[%s315] ss:$8 sm:$0x3] %vm311, 0.0
        %317 = vst.msk [vmem:[%s315] ss:$8 sm:$0x0] %vm311, 0.0
        %s318 = scalar_lea.vmem [#allocation2], 48
        %319 = vst.msk [vmem:[%s318] ss:$8 sm:$0x3] %vm311, 0.0
        %320 = vst.msk [vmem:[%s318] ss:$8 sm:$0x0] %vm311, 0.0
        %s321 = scalar_lea.vmem [#allocation2], 112
        %322 = vst.msk [vmem:[%s321] ss:$8 sm:$0x3] %vm311, 0.0
        %323 = vst.msk [vmem:[%s321] ss:$8 sm:$0x0] %vm311, 0.0
        %vm324 = vcmask 130048
        %325 = vst.msk [vmem:[#allocation2 + $0x18] sm:$0xff] %vm324, %v303
        %326 = vst.msk [vmem:[#allocation2 + $0x28] sm:$0xff] %vm324, %v304
        %327 = vst.msk [vmem:[#allocation2 + $0x58] sm:$0xff] %vm324, %v305
        %328 = vst.msk [vmem:[#allocation2 + $0x68] sm:$0xff] %vm324, %v306
        %s329 = sld [smem:[#allocation4 + %s307]]
        %v330 = vld [vmem:[#allocation2] sm:$0x80]
        %v331 = vld [vmem:[#allocation2 + $0x8] sm:$0x80]
        %v332 = vld [vmem:[#allocation2 + $0x10] sm:$0xff]
        %v333 = vld [vmem:[#allocation2 + $0x18] sm:$0xff]
        %v334 = vld [vmem:[#allocation2 + $0x20] sm:$0x7f]
        %v335 = vld [vmem:[#allocation2 + $0x28] sm:$0x7f]
        %v336 = vld [vmem:[#allocation2 + $0x40] sm:$0x80]
        %v337 = vld [vmem:[#allocation2 + $0x48] sm:$0x80]
        %v338 = vld [vmem:[#allocation2 + $0x50] sm:$0xff]
        %v339 = vld [vmem:[#allocation2 + $0x58] sm:$0xff]
        %v340 = vld [vmem:[#allocation2 + $0x60] sm:$0x7f]
        %v341 = vld [vmem:[#allocation2 + $0x68] sm:$0x7f]
        %v342 = vstv %s329
        %v343 = vmul.f32 %v342, %v330
        %v344 = vmul.f32 %v342, %v331
        %v345 = vmul.f32 %v342, %v332
        %v346 = vmul.f32 %v342, %v333
        %v347 = vmul.f32 %v342, %v334
        %v348 = vmul.f32 %v342, %v335
        %v349 = vmul.f32 %v342, %v336
        %v350 = vmul.f32 %v342, %v337
        %v351 = vmul.f32 %v342, %v338
        %v352 = vmul.f32 %v342, %v339
        %v353 = vmul.f32 %v342, %v340
        %v354 = vmul.f32 %v342, %v341
        %s355 = sadd.s32 %s307, 3
        %s356 = sld [smem:[#allocation4 + %s355]]
        %v357 = vld [vmem:[#allocation2 + $0x20] sm:$0xff]
        %v358 = vld [vmem:[#allocation2 + $0x28] sm:$0xff]
        %v359 = vld [vmem:[#allocation2 + $0x60] sm:$0xff]
        %v360 = vld [vmem:[#allocation2 + $0x68] sm:$0xff]
        %v361 = vstv %s356
        %v362 = vmul.f32 %v361, %v332
        %v363 = vmul.f32 %v361, %v333
        %v364 = vmul.f32 %v361, %v357
        %v365 = vmul.f32 %v361, %v358
        %v366 = vmul.f32 %v361, %v338
        %v367 = vmul.f32 %v361, %v339
        %v368 = vmul.f32 %v361, %v359
        %v369 = vmul.f32 %v361, %v360
        %vm378 = vcmask 1046528
        %v379 = vrot.slane %v362, 1
        %v380 = vrot.slane %v363, 1
        %v381 = vrot.slane %v364, 1
        %v382 = vsel %vm378, %v379, %v381
        %v383 = vrot.slane %v365, 1
        %v384 = vsel %vm378, %v380, %v383
        %v385 = vrot.slane %v366, 1
        %v386 = vrot.slane %v367, 1
        %v387 = vrot.slane %v368, 1
        %v388 = vsel %vm378, %v385, %v387
        %v389 = vrot.slane %v369, 1
        %v390 = vsel %vm378, %v386, %v389
        %v403 = vadd.f32 %v343, %v379
        %v404 = vadd.f32 %v344, %v380
        %v405 = vadd.f32 %v345, %v382
        %v406 = vadd.f32 %v346, %v384
        %v407 = vadd.f32 %v347, %v381
        %v408 = vadd.f32 %v348, %v383
        %v409 = vadd.f32 %v349, %v385
        %v410 = vadd.f32 %v350, %v386
        %v411 = vadd.f32 %v351, %v388
        %v412 = vadd.f32 %v352, %v390
        %v413 = vadd.f32 %v353, %v387
        %v414 = vadd.f32 %v354, %v389
        %s415 = sadd.s32 %s307, 6
        %s416 = sld [smem:[#allocation4 + %s415]]
        %v417 = vld [vmem:[#allocation2 + $0x10] sm:$0xfe]
        %v418 = vld [vmem:[#allocation2 + $0x18] sm:$0xfe]
        %v419 = vld [vmem:[#allocation2 + $0x20] sm:$0xff]
        %v420 = vld [vmem:[#allocation2 + $0x28] sm:$0xff]
        %v421 = vld [vmem:[#allocation2 + $0x30] sm:$0x1]
        %v422 = vld [vmem:[#allocation2 + $0x38] sm:$0x1]
        %v423 = vld [vmem:[#allocation2 + $0x50] sm:$0xfe]
        %v424 = vld [vmem:[#allocation2 + $0x58] sm:$0xfe]
        %v425 = vld [vmem:[#allocation2 + $0x60] sm:$0xff]
        %v426 = vld [vmem:[#allocation2 + $0x68] sm:$0xff]
        %v427 = vld [vmem:[#allocation2 + $0x70] sm:$0x1]
        %v428 = vld [vmem:[#allocation2 + $0x78] sm:$0x1]
        %v429 = vstv %s416
        %v430 = vmul.f32 %v429, %v417
        %v431 = vmul.f32 %v429, %v418
        %v432 = vmul.f32 %v429, %v419
        %v433 = vmul.f32 %v429, %v420
        %v434 = vmul.f32 %v429, %v421
        %v435 = vmul.f32 %v429, %v422
        %v436 = vmul.f32 %v429, %v423
        %v437 = vmul.f32 %v429, %v424
        %v438 = vmul.f32 %v429, %v425
        %v439 = vmul.f32 %v429, %v426
        %v440 = vmul.f32 %v429, %v427
        %v441 = vmul.f32 %v429, %v428
        %vm454 = vcmask 1045504
        %v455 = vrot.slane %v430, 2
        %v456 = vrot.slane %v431, 2
        %v457 = vrot.slane %v432, 2
        %v458 = vsel %vm454, %v455, %v457
        %v459 = vrot.slane %v433, 2
        %v460 = vsel %vm454, %v456, %v459
        %v461 = vrot.slane %v434, 2
        %v462 = vsel %vm454, %v457, %v461
        %v463 = vrot.slane %v435, 2
        %v464 = vsel %vm454, %v459, %v463
        %v465 = vrot.slane %v436, 2
        %v466 = vrot.slane %v437, 2
        %v467 = vrot.slane %v438, 2
        %v468 = vsel %vm454, %v465, %v467
        %v469 = vrot.slane %v439, 2
        %v470 = vsel %vm454, %v466, %v469
        %v471 = vrot.slane %v440, 2
        %v472 = vsel %vm454, %v467, %v471
        %v473 = vrot.slane %v441, 2
        %v474 = vsel %vm454, %v469, %v473
        %v487 = vadd.f32 %v403, %v455
        %v488 = vadd.f32 %v404, %v456
        %v489 = vadd.f32 %v405, %v458
        %v490 = vadd.f32 %v406, %v460
        %v491 = vadd.f32 %v407, %v462
        %v492 = vadd.f32 %v408, %v464
        %v493 = vadd.f32 %v409, %v465
        %v494 = vadd.f32 %v410, %v466
        %v495 = vadd.f32 %v411, %v468
        %v496 = vadd.f32 %v412, %v470
        %v497 = vadd.f32 %v413, %v472
        %v498 = vadd.f32 %v414, %v474
        %s499 = sadd.s32 %s307, 1
        %s500 = sld [smem:[#allocation4 + %s499]]
        %v501 = vstv %s500
        %v502 = vmul.f32 %v501, %v331
        %v503 = vmul.f32 %v501, %v333
        %v504 = vmul.f32 %v501, %v335
        %v505 = vmul.f32 %v501, %v337
        %v506 = vmul.f32 %v501, %v339
        %v507 = vmul.f32 %v501, %v341
        %s508 = sadd.s32 %s307, 4
        %s509 = sld [smem:[#allocation4 + %s508]]
        %v510 = vstv %s509
        %v511 = vmul.f32 %v510, %v303
        %v512 = vmul.f32 %v510, %v304
        %v513 = vmul.f32 %v510, %v305
        %v514 = vmul.f32 %v510, %v306
        %v519 = vrot.slane %v511, 1
        %v520 = vrot.slane %v512, 1
        %v521 = vsel %vm378, %v519, %v520
        %v522 = vrot.slane %v513, 1
        %v523 = vrot.slane %v514, 1
        %v524 = vsel %vm378, %v522, %v523
        %v531 = vadd.f32 %v502, %v519
        %v532 = vadd.f32 %v503, %v521
        %v533 = vadd.f32 %v504, %v520
        %v534 = vadd.f32 %v505, %v522
        %v535 = vadd.f32 %v506, %v524
        %v536 = vadd.f32 %v507, %v523
        %s537 = sadd.s32 %s307, 7
        %s538 = sld [smem:[#allocation4 + %s537]]
        %v539 = vstv %s538
        %v540 = vmul.f32 %v539, %v418
        %v541 = vmul.f32 %v539, %v420
        %v542 = vmul.f32 %v539, %v422
        %v543 = vmul.f32 %v539, %v424
        %v544 = vmul.f32 %v539, %v426
        %v545 = vmul.f32 %v539, %v428
        %v552 = vrot.slane %v540, 2
        %v553 = vrot.slane %v541, 2
        %v554 = vsel %vm454, %v552, %v553
        %v555 = vrot.slane %v542, 2
        %v556 = vsel %vm454, %v553, %v555
        %v557 = vrot.slane %v543, 2
        %v558 = vrot.slane %v544, 2
        %v559 = vsel %vm454, %v557, %v558
        %v560 = vrot.slane %v545, 2
        %v561 = vsel %vm454, %v558, %v560
        %v568 = vadd.f32 %v531, %v552
        %v569 = vadd.f32 %v532, %v554
        %v570 = vadd.f32 %v533, %v556
        %v571 = vadd.f32 %v534, %v557
        %v572 = vadd.f32 %v535, %v559
        %v573 = vadd.f32 %v536, %v561
        %s574 = sadd.s32 %s307, 2
        %s575 = sld [smem:[#allocation4 + %s574]]
        %v576 = vstv %s575
        %v577 = vmul.f32 %v576, %v331
        %v578 = vmul.f32 %v576, %v333
        %v579 = vmul.f32 %v576, %v335
        %v580 = vmul.f32 %v576, %v337
        %v581 = vmul.f32 %v576, %v339
        %v582 = vmul.f32 %v576, %v341
        %s583 = sadd.s32 %s307, 5
        %s584 = sld [smem:[#allocation4 + %s583]]
        %v585 = vstv %s584
        %v586 = vmul.f32 %v585, %v333
        %v587 = vmul.f32 %v585, %v358
        %v588 = vmul.f32 %v585, %v339
        %v589 = vmul.f32 %v585, %v360
        %v594 = vrot.slane %v586, 1
        %v595 = vrot.slane %v587, 1
        %v596 = vsel %vm378, %v594, %v595
        %v597 = vrot.slane %v588, 1
        %v598 = vrot.slane %v589, 1
        %v599 = vsel %vm378, %v597, %v598
        %v606 = vadd.f32 %v577, %v594
        %v607 = vadd.f32 %v578, %v596
        %v608 = vadd.f32 %v579, %v595
        %v609 = vadd.f32 %v580, %v597
        %v610 = vadd.f32 %v581, %v599
        %v611 = vadd.f32 %v582, %v598
        %s612 = sadd.s32 %s307, 8
        %s613 = sld [smem:[#allocation4 + %s612]]
        %v614 = vstv %s613
        %v615 = vmul.f32 %v614, %v418
        %v616 = vmul.f32 %v614, %v420
        %v617 = vmul.f32 %v614, %v422
        %v618 = vmul.f32 %v614, %v424
        %v619 = vmul.f32 %v614, %v426
        %v620 = vmul.f32 %v614, %v428
        %v627 = vrot.slane %v615, 2
        %v628 = vrot.slane %v616, 2
        %v629 = vsel %vm454, %v627, %v628
        %v630 = vrot.slane %v617, 2
        %v631 = vsel %vm454, %v628, %v630
        %v632 = vrot.slane %v618, 2
        %v633 = vrot.slane %v619, 2
        %v634 = vsel %vm454, %v632, %v633
        %v635 = vrot.slane %v620, 2
        %v636 = vsel %vm454, %v633, %v635
        %v643 = vadd.f32 %v606, %v627
        %v644 = vadd.f32 %v607, %v629
        %v645 = vadd.f32 %v608, %v631
        %v646 = vadd.f32 %v609, %v632
        %v647 = vadd.f32 %v610, %v634
        %v648 = vadd.f32 %v611, %v636
        %v649 = vlaneseq
        %v650 = vand.u32 %v649, 127
        %vm651 = vcmp.gt.s32.totalorder %v650, 0
        %v652 = vsel %vm651, 1, 0
        %vm653 = vcmp.eq.s32.totalorder %v652, 1
        %vm666 = vcmask 1040384
        %v667 = vrot.slane %v487, 7
        %v668 = vrot.slane %v489, 7
        %v669 = vsel %vm666, %v667, %v668
        %v670 = vrot.slane %v488, 7
        %v671 = vrot.slane %v490, 7
        %v672 = vsel %vm666, %v670, %v671
        %v673 = vrot.slane %v491, 7
        %v674 = vsel %vm666, %v668, %v673
        %v675 = vrot.slane %v492, 7
        %v676 = vsel %vm666, %v671, %v675
        %v677 = vrot.slane %v493, 7
        %v678 = vrot.slane %v495, 7
        %v679 = vsel %vm666, %v677, %v678
        %v680 = vrot.slane %v494, 7
        %v681 = vrot.slane %v496, 7
        %v682 = vsel %vm666, %v680, %v681
        %v683 = vrot.slane %v497, 7
        %v684 = vsel %vm666, %v678, %v683
        %v685 = vrot.slane %v498, 7
        %v686 = vsel %vm666, %v681, %v685
        %687 = vrot.lane.b32.xlu0 %v669, 1
        %v688 = vpop.permute.xlu0 %687
        %689 = vrot.lane.b32.xlu0 %v672, 1
        %v690 = vpop.permute.xlu0 %689
        %691 = vrot.lane.b32.xlu0 %v674, 1
        %v692 = vpop.permute.xlu0 %691
        %693 = vrot.lane.b32.xlu0 %v676, 1
        %v694 = vpop.permute.xlu0 %693
        %695 = vrot.lane.b32.xlu0 %v679, 1
        %v696 = vpop.permute.xlu0 %695
        %697 = vrot.lane.b32.xlu0 %v682, 1
        %v698 = vpop.permute.xlu0 %697
        %699 = vrot.lane.b32.xlu0 %v684, 1
        %v700 = vpop.permute.xlu0 %699
        %701 = vrot.lane.b32.xlu0 %v686, 1
        %v702 = vpop.permute.xlu0 %701
        %vm703 = vcmask 7168
        %v704 = vsel %vm703, %v688, %v690
        %v705 = vsel %vm703, %v692, %v694
        %v706 = vsel %vm703, %v696, %v698
        %v707 = vsel %vm703, %v700, %v702
        %v712 = vsel %vm653, %v704, 0.0
        %v713 = vsel %vm653, %v705, 0.0
        %v714 = vsel %vm653, %v706, 0.0
        %v715 = vsel %vm653, %v707, 0.0
        %vm716 = vcmp.lt.s32.totalorder %v650, 15
        %v717 = vsel %vm716, 1, 0
        %vm718 = vcmp.eq.s32.totalorder %v717, 1
        %v725 = vrot.slane %v643, 7
        %v726 = vrot.slane %v644, 7
        %v727 = vsel %vm666, %v725, %v726
        %v728 = vrot.slane %v645, 7
        %v729 = vsel %vm666, %v726, %v728
        %v730 = vrot.slane %v646, 7
        %v731 = vrot.slane %v647, 7
        %v732 = vsel %vm666, %v730, %v731
        %v733 = vrot.slane %v648, 7
        %v734 = vsel %vm666, %v731, %v733
        %735 = vrot.lane.b32.xlu0 %v727, 127
        %v736 = vpop.permute.xlu0 %735
        %737 = vrot.lane.b32.xlu0 %v729, 127
        %v738 = vpop.permute.xlu0 %737
        %739 = vrot.lane.b32.xlu0 %v732, 127
        %v740 = vpop.permute.xlu0 %739
        %741 = vrot.lane.b32.xlu0 %v734, 127
        %v742 = vpop.permute.xlu0 %741
        %v747 = vsel %vm718, %v736, 0.0
        %v748 = vsel %vm718, %v738, 0.0
        %v749 = vsel %vm718, %v740, 0.0
        %v750 = vsel %vm718, %v742, 0.0
        %v757 = vrot.slane %v568, 7
        %v758 = vrot.slane %v569, 7
        %v759 = vsel %vm666, %v757, %v758
        %v760 = vrot.slane %v570, 7
        %v761 = vsel %vm666, %v758, %v760
        %v762 = vrot.slane %v571, 7
        %v763 = vrot.slane %v572, 7
        %v764 = vsel %vm666, %v762, %v763
        %v765 = vrot.slane %v573, 7
        %v766 = vsel %vm666, %v763, %v765
        %v771 = vadd.f32 %v712, %v759
        %v772 = vadd.f32 %v713, %v761
        %v773 = vadd.f32 %v714, %v764
        %v774 = vadd.f32 %v715, %v766
        %v775 = vadd.f32 %v771, %v747
        %v776 = vadd.f32 %v772, %v748
        %v777 = vadd.f32 %v773, %v749
        %v778 = vadd.f32 %v774, %v750
        %s779 = sld [smem:[#allocation7 + %s25]]
        %v780 = vstv %s779
        %v781 = vmul.f32 %v780, %v775
        %v782 = vmul.f32 %v780, %v776
        %v783 = vmul.f32 %v780, %v777
        %v784 = vmul.f32 %v780, %v778
        %s785 = sld [smem:[#allocation9 + %s25]]
        %v786 = vstv %s785
        %v787 = vadd.f32 %v781, %v786
        %v788 = vadd.f32 %v782, %v786
        %v789 = vadd.f32 %v783, %v786
        %v790 = vadd.f32 %v784, %v786
        %v791 = vmax.f32 %v303, %v787
        %v792 = vmax.f32 %v304, %v788
        %v793 = vmax.f32 %v305, %v789
        %v794 = vmax.f32 %v306, %v790
        %795 = vst.msk [vmem:[%s300] sm:$0xff] %vm324, %v791
        %796 = vst.msk [vmem:[%s300 + $0x8] sm:$0xff] %vm324, %v792
        %797 = vst.msk [vmem:[%s300 + $0x10] sm:$0xff] %vm324, %v793
        %798 = vst.msk [vmem:[%s300 + $0x18] sm:$0xff] %vm324, %v794
        %s799 = sand.u32 %s133, 1
        %s800 = scalar_lea.sflag [#allocation5], %s799
        %s801 = sand.u32 %s133, 1
        %s802 = smul.addr %s801, 32
        %s803 = scalar_lea.vmem [#allocation10], %s802
        // Predicated region
        $region87: #{frelu.3} parent=69 // pred_check
          %p804 = pneg %p143
        $region88: #{frelu.3} parent=69 // pred_check_branch
          %806 = sbr.rel (%p804) target = $region90
        $region89: #{frelu.3} parent=69 // pred_region
          #allocation12 [shape = 'u32[6]{0}', space=smem, size = 0x18, scoped, tag = 'DMA stride descriptor']
          %s807 = smul.u32 2, %s24
          %s809 = ssub.s32 512, 512
          %810 = vsyncadd %s800, %s809
          %s811 = smul.addr %s25, 2
          %s812 = smul.addr %s807, 8
          %s813 = sadd.s32 %s811, %s812
          %s814 = smul.addr %s813, 128
          %s815 = scalar_lea.hbm %s4, %s814
          %s817 = sshll.u32 1, 14
          %s818 = sxor.u32 4294967295, %s817
          %s821 = sshll.u32 7, 18
          %s822 = sxor.u32 4294967295, %s821
          %s823 = sand.u32 0, %s822
          %s825 = sor.u32 %s823, 0
          %s827 = sshll.u32 3, 24
          %s828 = sxor.u32 4294967295, %s827
          %s829 = sand.u32 %s825, %s828
          %s831 = sor.u32 %s829, 0
          %s832 = sshll.u32 %s803, 4
          %s833 = int_to_ptr.vmem [resolvable:$true] %s832
          %839 = sst [smem:[#allocation12]] 256
          %s840 = scalar_lea.smem [#allocation12], 1
          %841 = sst [smem:[%s840]] 1024
          %s842 = scalar_lea.smem [#allocation12], 2
          %843 = sst [smem:[%s842]] 2
          %s844 = scalar_lea.smem [#allocation12], 3
          %845 = sst [smem:[%s844]] 128
          %s846 = scalar_lea.smem [#allocation12], 4
          %847 = sst [smem:[%s846]] 128
          %s848 = scalar_lea.smem [#allocation12], 5
          %849 = sst [smem:[%s848]] 8
          %851 = dma.general %s833, 512, %s815, %s800, [#allocation11], [#allocation12], %s831, 0
        $region90: #{frelu.3} parent=69 // pred_fallthru
          _
      $region70: #{frelu.3} parent=5 // pred_fallthru
        _
      %p852 = scmp.le.s32.totalorder 2, %s15
      // Predicated region
      $region91: #{frelu.3} parent=5 // pred_check
        %p853 = pneg %p852
      $region92: #{frelu.3} parent=5 // pred_check_branch
        %855 = sbr.rel (%p853) target = $region94
      $region93: #{frelu.3} parent=5 // pred_region
        %s856 = ssub.s32 %s15, 2
        // Predicated region
        $region95: #{frelu.3} parent=93 // pred_check
          %p857 = pneg %p149
        $region96: #{frelu.3} parent=93 // pred_check_branch
          %859 = sbr.rel (%p857) target = $region98
        $region97: #{frelu.3} parent=93 // pred_region
          %s860 = sand.u32 %s134, 1
          %s861 = scalar_lea.sflag [#allocation5], %s860
          %s862 = sand.u32 %s134, 1
          %s863 = smul.addr %s862, 32
          %s864 = scalar_lea.vmem [#allocation10], %s863
          %865 = dma.done %s861, 512
        $region98: #{frelu.3} parent=93 // pred_fallthru
          _
      $region94: #{frelu.3} parent=5 // pred_fallthru
        _
    $region6: #{frelu.3} parent=1 // loop_footer
      %s19 = sadd.s32 1, %s15
    $region7: #{frelu.3} parent=1 // loop_footer_branch
      %14 = sbr.rel target = $region3
    $region8: #{frelu.3} parent=1 // loop_exit
      _
    %866 = vsyncpa [#allocation5], 1
    %s867 = scalar_lea.sflag [#allocation5], 1
    %868 = vsyncpa %s867, 1
    %869 = vsyncpa [#allocation6], 1
    %s870 = scalar_lea.sflag [#allocation6], 1
    %871 = vsyncpa %s870, 1
    %872 = vsyncpa [#allocation8], 1

</llo_original>
